<compile_context>
chip_gen: v5e
topology: v5e:2x2
jax: 0.10.0
libtpu: 0.0.40
codegen_flags: <defaults>
</compile_context>

<pallas_src>
import jax
import jax.numpy as jnp
from jax import lax
from jax.experimental import pallas as pl
from jax.experimental.pallas import tpu as pltpu

FILTER_LENGTH = 32                        # self.N
HOP_LENGTH = 16                           # hop_length
NB_FREQ = FILTER_LENGTH // 2 + 1          # 17
N_CHROMA = 32                             # n_chroma
F_PAD = 2 * FILTER_LENGTH                 # 64: real rows [0,17), imag rows [32,49)
TIME_TILE = 512                           # frames per grid step (multiple of 128 and 8);
                                          # raise to 2048-4096 for very long audio.


def dft_chroma_kernel(xa_ref, xb_ref, wa_ref, wb_ref, bri_ref, wc_ref, bc_ref,
                      y_ref, p_ref, z_ref):
    """Fused DFT(real+imag) -> power -> chroma for one tile of TIME_TILE frames.

    xa_ref : (TIME_TILE, 16)  first 16 samples of each frame in this tile
    xb_ref : (TIME_TILE, 16)  last 16 samples of each frame (one-row-shifted view)
    wa/wb  : (64, 16)         fused real+imag DFT weights, K-split over the halves
    bri    : (64, 1)          fused bias (zero in the padding rows)
    wc     : (32, 32)         chroma weights, columns >= 17 are zero
    bc     : (32, 1)          chroma bias
    """
    xa = xa_ref[...]
    xb = xb_ref[...]
    # Fused real/imag DFT as one (64, tT) result; the frame assembly is folded
    # into the matmul by contracting the 16-sample axis of both half-frame
    # blocks against the corresponding weight halves ('rn,tn->rt').
    dn = (((1,), (1,)), ((), ()))
    y64 = (lax.dot_general(wa_ref[...], xa, dn, preferred_element_type=jnp.float32)
           + lax.dot_general(wb_ref[...], xb, dn, preferred_element_type=jnp.float32)
           + bri_ref[...])                                            # (64, tT)
    # Power spectrum.  Padding rows are exactly zero (weights & bias padded with 0),
    # and real/imag sit at sublane offsets 0 and 32 so both slices stay aligned.
    p32 = y64[0:32, :] * y64[0:32, :] + y64[32:64, :] * y64[32:64, :]  # (32, tT)
    # Chroma conv: kernel_size == nb_freq -> a single matmul over (padded) freq bins.
    z = (jnp.dot(wc_ref[...], p32, preferred_element_type=jnp.float32)
         + bc_ref[...])                                                # (32, tT)

    y_ref[0] = y64[0:NB_FREQ, :]            # y_real  (17, tT)
    y_ref[1] = y64[32:32 + NB_FREQ, :]      # y_imag  (17, tT)
    p_ref[...] = p32[0:NB_FREQ, :]          # power   (17, tT)
    z_ref[...] = z                          # chroma  (32, tT)


def init_params(key):
    """Deterministic PyTorch-style Conv1d default init (uniform +/- 1/sqrt(fan_in))."""
    k1, k2, k3, k4, k5, k6 = jax.random.split(key, 6)
    bound_dft = 1.0 / jnp.sqrt(jnp.float32(1 * FILTER_LENGTH))
    bound_chr = 1.0 / jnp.sqrt(jnp.float32(1 * NB_FREQ))
    params = {
        "wr": jax.random.uniform(k1, (NB_FREQ, 1, FILTER_LENGTH), jnp.float32,
                                 -bound_dft, bound_dft),
        "br": jax.random.uniform(k2, (NB_FREQ,), jnp.float32, -bound_dft, bound_dft),
        "wi": jax.random.uniform(k3, (NB_FREQ, 1, FILTER_LENGTH), jnp.float32,
                                 -bound_dft, bound_dft),
        "bi": jax.random.uniform(k4, (NB_FREQ,), jnp.float32, -bound_dft, bound_dft),
        "wc": jax.random.uniform(k5, (N_CHROMA, 1, NB_FREQ), jnp.float32,
                                 -bound_chr, bound_chr),
        "bc": jax.random.uniform(k6, (N_CHROMA,), jnp.float32, -bound_chr, bound_chr),
    }
    # TODO(synk): cos/sin DFT & librosa chroma filterbank init (init_*_kernels=True
    # branches) not reproduced — the module's defaults keep the random Conv1d init.
    return params


def _prep_weights(params):
    """Repack the Conv1d weights into the fused, zero-padded kernel layout."""
    wr = params["wr"][:, 0, :]                              # (17, 32)
    wi = params["wi"][:, 0, :]                              # (17, 32)
    w64 = jnp.zeros((F_PAD, FILTER_LENGTH), jnp.float32)
    w64 = w64.at[0:NB_FREQ].set(wr).at[32:32 + NB_FREQ].set(wi)
    b64 = jnp.zeros((F_PAD, 1), jnp.float32)
    b64 = (b64.at[0:NB_FREQ, 0].set(params["br"])
               .at[32:32 + NB_FREQ, 0].set(params["bi"]))
    wa = w64[:, :HOP_LENGTH]                                # (64, 16) first-half weights
    wb = w64[:, HOP_LENGTH:]                                # (64, 16) second-half weights
    wc = jnp.zeros((N_CHROMA, N_CHROMA), jnp.float32)
    wc = wc.at[:, 0:NB_FREQ].set(params["wc"][:, 0, :])     # (32, 32)
    bc = params["bc"][:, None]                              # (32, 1)
    return wa, wb, b64, wc, bc


@jax.jit
def conv_dft_forward(x, params):
    """x: (1, L) float32.  Returns (y, z, power_frame) with PyTorch shapes."""
    B, L = x.shape
    assert B == 1, "ConvDFT.forward is only well-defined for batch size 1"
    T = (L - FILTER_LENGTH) // HOP_LENGTH + 1
    tT = TIME_TILE
    n_tiles = pl.cdiv(T, tT)

    # Half-frame views of the signal: row t of xa2d / xb2d holds samples
    # [16t, 16t+16) / [16t+16, 16t+32), i.e. the two halves of frame t.
    # (one cheap shifted slice of the signal; no (T, 32) frame gather in HBM)
    x1 = x[0]
    xa2d = x1[: HOP_LENGTH * (T + 1)].reshape(T + 1, HOP_LENGTH)
    xb2d = x1[HOP_LENGTH: HOP_LENGTH * (T + 1)].reshape(T, HOP_LENGTH)

    wa, wb, b64, wc, bc = _prep_weights(params)

    weight_spec = lambda shp: pl.BlockSpec(shp, lambda i: (0, 0))

    y3, p, z = pl.pallas_call(
        dft_chroma_kernel,
        out_shape=(
            jax.ShapeDtypeStruct((2, NB_FREQ, T), jnp.float32),   # [real; imag]
            jax.ShapeDtypeStruct((NB_FREQ, T), jnp.float32),      # power
            jax.ShapeDtypeStruct((N_CHROMA, T), jnp.float32),     # chroma
        ),
        grid=(n_tiles,),
        in_specs=[
            pl.BlockSpec((tT, HOP_LENGTH), lambda i: (i, 0)),     # first half-frames
            pl.BlockSpec((tT, HOP_LENGTH), lambda i: (i, 0)),     # second half-frames
            weight_spec((F_PAD, HOP_LENGTH)),                     # wa
            weight_spec((F_PAD, HOP_LENGTH)),                     # wb
            weight_spec((F_PAD, 1)),                              # fused bias
            weight_spec((N_CHROMA, N_CHROMA)),                    # chroma weights
            weight_spec((N_CHROMA, 1)),                           # chroma bias
        ],
        out_specs=(
            pl.BlockSpec((2, NB_FREQ, tT), lambda i: (0, 0, i)),
            pl.BlockSpec((NB_FREQ, tT), lambda i: (0, i)),
            pl.BlockSpec((N_CHROMA, tT), lambda i: (0, i)),
        ),
        compiler_params=pltpu.CompilerParams(
            dimension_semantics=("parallel",),
            vmem_limit_bytes=32 * 1024 * 1024,
        ),
    )(xa2d, xb2d, wa, wb, b64, wc, bc)

    # Outputs are already channel-first; only cheap reshapes remain.
    y = y3.reshape(2 * NB_FREQ, T)              # (34, T) == cat([y_real, y_imag], 0)
    power_frame = p                             # (17, T)
    z_out = jnp.transpose(z)[:, :, None]        # (T, 32, 1)
    return y, z_out, power_frame


def _reference_forward(x, params):
    """Plain-JAX reference for correctness checking."""
    L = x.shape[1]
    T = (L - FILTER_LENGTH) // HOP_LENGTH + 1
    idx = jnp.arange(T)[:, None] * HOP_LENGTH + jnp.arange(FILTER_LENGTH)[None, :]
    frames = x[0][idx]                                                   # (T, 32)
    yr = frames @ params["wr"][:, 0, :].T + params["br"][None, :]        # (T, 17)
    yi = frames @ params["wi"][:, 0, :].T + params["bi"][None, :]
    p = yr ** 2 + yi ** 2
    z = p @ params["wc"][:, 0, :].T + params["bc"][None, :]              # (T, 32)
    y = jnp.concatenate([yr.T, yi.T], axis=0)                            # (34, T)
    return y, z[:, :, None], p.T


if __name__ == "__main__":
    key = jax.random.PRNGKey(0)
    k_par, k_x = jax.random.split(key)
    params = init_params(k_par)

    # ~1 s of 16 kHz audio: T = (L - 32)//16 + 1 = 1000 frames -> 2 time tiles
    # (exercises the pipelined grid and a ragged final tile).
    num_frames = 1000
    num_samples = (num_frames - 1) * HOP_LENGTH + FILTER_LENGTH          # 16016
    x = jax.random.normal(k_x, (1, num_samples), dtype=jnp.float32)

    y, z, power_frame = conv_dft_forward(x, params)
    jax.block_until_ready((y, z, power_frame))

    # sanity check against the plain-JAX reference
    y_ref, z_ref, p_ref = _reference_forward(x, params)
    assert y.shape == (2 * NB_FREQ, num_frames)
    assert z.shape == (num_frames, N_CHROMA, 1)
    assert power_frame.shape == (NB_FREQ, num_frames)
    assert jnp.allclose(y, y_ref, atol=1e-3, rtol=1e-3)
    assert jnp.allclose(z, z_ref, atol=1e-3, rtol=1e-3)
    assert jnp.allclose(power_frame, p_ref, atol=1e-3, rtol=1e-3)

    print("KERNEL_OK")
</pallas_src>

<mosaic_0001>
module attributes {stable_mosaic.version = 11 : i64} {
  func.func @dft_chroma_kernel(%arg0: i32, %arg1: memref<512x16xf32, #tpu.memory_space<vmem>>, %arg2: memref<512x16xf32, #tpu.memory_space<vmem>>, %arg3: memref<64x16xf32, #tpu.memory_space<vmem>>, %arg4: memref<64x16xf32, #tpu.memory_space<vmem>>, %arg5: memref<64x1xf32, #tpu.memory_space<vmem>>, %arg6: memref<32x32xf32, #tpu.memory_space<vmem>>, %arg7: memref<32x1xf32, #tpu.memory_space<vmem>>, %arg8: memref<2x17x512xf32, #tpu.memory_space<vmem>>, %arg9: memref<17x512xf32, #tpu.memory_space<vmem>>, %arg10: memref<32x512xf32, #tpu.memory_space<vmem>>) attributes {dimension_semantics = [#tpu.dimension_semantics<parallel>], iteration_bounds = array<i64: 2>, scalar_prefetch = 0 : i64, scratch_operands = 0 : i64, tpu.core_type = #tpu.core_type<tc>, window_params = [{transform_indices = @transform_0, window_bounds = array<i64: 512, 16>}, {transform_indices = @transform_1, window_bounds = array<i64: 512, 16>}, {pipeline_mode = #tpu.pipeline_mode<synchronous>, transform_indices = @transform_2, window_bounds = array<i64: 64, 16>}, {pipeline_mode = #tpu.pipeline_mode<synchronous>, transform_indices = @transform_3, window_bounds = array<i64: 64, 16>}, {pipeline_mode = #tpu.pipeline_mode<synchronous>, transform_indices = @transform_4, window_bounds = array<i64: 64, 1>}, {pipeline_mode = #tpu.pipeline_mode<synchronous>, transform_indices = @transform_5, window_bounds = array<i64: 32, 32>}, {pipeline_mode = #tpu.pipeline_mode<synchronous>, transform_indices = @transform_6, window_bounds = array<i64: 32, 1>}, {transform_indices = @transform_7, window_bounds = array<i64: 2, 17, 512>}, {transform_indices = @transform_8, window_bounds = array<i64: 17, 512>}, {transform_indices = @transform_9, window_bounds = array<i64: 32, 512>}]} {
    %c0 = arith.constant 0 : index
    %c0_0 = arith.constant 0 : index
    %0 = vector.load %arg1[%c0, %c0_0] : memref<512x16xf32, #tpu.memory_space<vmem>>, vector<512x16xf32>
    %c0_1 = arith.constant 0 : index
    %c0_2 = arith.constant 0 : index
    %1 = vector.load %arg2[%c0_1, %c0_2] : memref<512x16xf32, #tpu.memory_space<vmem>>, vector<512x16xf32>
    %c0_3 = arith.constant 0 : index
    %c0_4 = arith.constant 0 : index
    %2 = vector.load %arg3[%c0_3, %c0_4] : memref<64x16xf32, #tpu.memory_space<vmem>>, vector<64x16xf32>
    %cst = arith.constant dense<0.000000e+00> : vector<64x512xf32>
    %3 = tpu.matmul %2, %0, %cst {dimension_numbers = #tpu.dot_dimension_numbers<[1], [1], [0], [0], [0, 0, 1, 0], [], []>} : vector<64x16xf32>, vector<512x16xf32>, vector<64x512xf32> -> vector<64x512xf32>
    %c0_5 = arith.constant 0 : index
    %c0_6 = arith.constant 0 : index
    %4 = vector.load %arg4[%c0_5, %c0_6] : memref<64x16xf32, #tpu.memory_space<vmem>>, vector<64x16xf32>
    %cst_7 = arith.constant dense<0.000000e+00> : vector<64x512xf32>
    %5 = tpu.matmul %4, %1, %cst_7 {dimension_numbers = #tpu.dot_dimension_numbers<[1], [1], [0], [0], [0, 0, 1, 0], [], []>} : vector<64x16xf32>, vector<512x16xf32>, vector<64x512xf32> -> vector<64x512xf32>
    %6 = arith.addf %3, %5 : vector<64x512xf32>
    %c0_8 = arith.constant 0 : index
    %c0_9 = arith.constant 0 : index
    %7 = vector.load %arg5[%c0_8, %c0_9] : memref<64x1xf32, #tpu.memory_space<vmem>>, vector<64x1xf32>
    %8 = vector.broadcast %7 : vector<64x1xf32> to vector<64x512xf32>
    %9 = arith.addf %6, %8 : vector<64x512xf32>
    %10 = vector.extract_strided_slice %9 {offsets = [0, 0], sizes = [32, 512], strides = [1, 1]} : vector<64x512xf32> to vector<32x512xf32>
    %11 = vector.extract_strided_slice %9 {offsets = [0, 0], sizes = [32, 512], strides = [1, 1]} : vector<64x512xf32> to vector<32x512xf32>
    %12 = arith.mulf %10, %11 : vector<32x512xf32>
    %13 = vector.extract_strided_slice %9 {offsets = [32, 0], sizes = [32, 512], strides = [1, 1]} : vector<64x512xf32> to vector<32x512xf32>
    %14 = vector.extract_strided_slice %9 {offsets = [32, 0], sizes = [32, 512], strides = [1, 1]} : vector<64x512xf32> to vector<32x512xf32>
    %15 = arith.mulf %13, %14 : vector<32x512xf32>
    %16 = arith.addf %12, %15 : vector<32x512xf32>
    %c0_10 = arith.constant 0 : index
    %c0_11 = arith.constant 0 : index
    %17 = vector.load %arg6[%c0_10, %c0_11] : memref<32x32xf32, #tpu.memory_space<vmem>>, vector<32x32xf32>
    %cst_12 = arith.constant dense<0.000000e+00> : vector<32x512xf32>
    %18 = tpu.matmul %17, %16, %cst_12 {dimension_numbers = #tpu.dot_dimension_numbers<[1], [0], [0], [1], [0, 0, 1, 1], [], []>} : vector<32x32xf32>, vector<32x512xf32>, vector<32x512xf32> -> vector<32x512xf32>
    %c0_13 = arith.constant 0 : index
    %c0_14 = arith.constant 0 : index
    %19 = vector.load %arg7[%c0_13, %c0_14] : memref<32x1xf32, #tpu.memory_space<vmem>>, vector<32x1xf32>
    %20 = vector.broadcast %19 : vector<32x1xf32> to vector<32x512xf32>
    %21 = arith.addf %18, %20 : vector<32x512xf32>
    %22 = vector.extract_strided_slice %9 {offsets = [0, 0], sizes = [17, 512], strides = [1, 1]} : vector<64x512xf32> to vector<17x512xf32>
    %c0_15 = arith.constant 0 : index
    %c0_16 = arith.constant 0 : index
    %c0_17 = arith.constant 0 : index
    %23 = vector.load %arg8[%c0_15, %c0_16, %c0_17] : memref<2x17x512xf32, #tpu.memory_space<vmem>>, vector<1x17x512xf32>
    %24 = vector.shape_cast %23 : vector<1x17x512xf32> to vector<17x512xf32>
    %25 = vector.shape_cast %22 : vector<17x512xf32> to vector<1x17x512xf32>
    tpu.vector_store %arg8[%c0_15, %c0_16, %c0_17], %25 {strides = array<i32>} : memref<2x17x512xf32, #tpu.memory_space<vmem>>, vector<1x17x512xf32>,
    %26 = vector.extract_strided_slice %9 {offsets = [32, 0], sizes = [17, 512], strides = [1, 1]} : vector<64x512xf32> to vector<17x512xf32>
    %c1 = arith.constant 1 : index
    %c0_18 = arith.constant 0 : index
    %c0_19 = arith.constant 0 : index
    %27 = vector.load %arg8[%c1, %c0_18, %c0_19] : memref<2x17x512xf32, #tpu.memory_space<vmem>>, vector<1x17x512xf32>
    %28 = vector.shape_cast %27 : vector<1x17x512xf32> to vector<17x512xf32>
    %29 = vector.shape_cast %26 : vector<17x512xf32> to vector<1x17x512xf32>
    tpu.vector_store %arg8[%c1, %c0_18, %c0_19], %29 {strides = array<i32>} : memref<2x17x512xf32, #tpu.memory_space<vmem>>, vector<1x17x512xf32>,
    %30 = vector.extract_strided_slice %16 {offsets = [0, 0], sizes = [17, 512], strides = [1, 1]} : vector<32x512xf32> to vector<17x512xf32>
    %c0_20 = arith.constant 0 : index
    %c0_21 = arith.constant 0 : index
    %31 = vector.load %arg9[%c0_20, %c0_21] : memref<17x512xf32, #tpu.memory_space<vmem>>, vector<17x512xf32>
    tpu.vector_store %arg9[%c0_20, %c0_21], %30 {strides = array<i32>} : memref<17x512xf32, #tpu.memory_space<vmem>>, vector<17x512xf32>,
    %c0_22 = arith.constant 0 : index
    %c0_23 = arith.constant 0 : index
    %32 = vector.load %arg10[%c0_22, %c0_23] : memref<32x512xf32, #tpu.memory_space<vmem>>, vector<32x512xf32>
    tpu.vector_store %arg10[%c0_22, %c0_23], %21 {strides = array<i32>} : memref<32x512xf32, #tpu.memory_space<vmem>>, vector<32x512xf32>,
    return
  }
  func.func @transform_0(%arg0: i32) -> (i32, i32) {
    %c0_i32 = arith.constant 0 : i32
    %c0_i32_0 = arith.constant 0 : i32
    return %arg0, %c0_i32 : i32, i32
  }
  func.func @transform_1(%arg0: i32) -> (i32, i32) {
    %c0_i32 = arith.constant 0 : i32
    %c0_i32_0 = arith.constant 0 : i32
    return %arg0, %c0_i32 : i32, i32
  }
  func.func @transform_2(%arg0: i32) -> (i32, i32) {
    %c0_i32 = arith.constant 0 : i32
    %c0_i32_0 = arith.constant 0 : i32
    %c0_i32_1 = arith.constant 0 : i32
    return %c0_i32, %c0_i32_0 : i32, i32
  }
  func.func @transform_3(%arg0: i32) -> (i32, i32) {
    %c0_i32 = arith.constant 0 : i32
    %c0_i32_0 = arith.constant 0 : i32
    %c0_i32_1 = arith.constant 0 : i32
    return %c0_i32, %c0_i32_0 : i32, i32
  }
  func.func @transform_4(%arg0: i32) -> (i32, i32) {
    %c0_i32 = arith.constant 0 : i32
    %c0_i32_0 = arith.constant 0 : i32
    %c0_i32_1 = arith.constant 0 : i32
    return %c0_i32, %c0_i32_0 : i32, i32
  }
  func.func @transform_5(%arg0: i32) -> (i32, i32) {
    %c0_i32 = arith.constant 0 : i32
    %c0_i32_0 = arith.constant 0 : i32
    %c0_i32_1 = arith.constant 0 : i32
    return %c0_i32, %c0_i32_0 : i32, i32
  }
  func.func @transform_6(%arg0: i32) -> (i32, i32) {
    %c0_i32 = arith.constant 0 : i32
    %c0_i32_0 = arith.constant 0 : i32
    %c0_i32_1 = arith.constant 0 : i32
    return %c0_i32, %c0_i32_0 : i32, i32
  }
  func.func @transform_7(%arg0: i32) -> (i32, i32, i32) {
    %c0_i32 = arith.constant 0 : i32
    %c0_i32_0 = arith.constant 0 : i32
    %c0_i32_1 = arith.constant 0 : i32
    return %c0_i32, %c0_i32_0, %arg0 : i32, i32, i32
  }
  func.func @transform_8(%arg0: i32) -> (i32, i32) {
    %c0_i32 = arith.constant 0 : i32
    %c0_i32_0 = arith.constant 0 : i32
    return %c0_i32, %arg0 : i32, i32
  }
  func.func @transform_9(%arg0: i32) -> (i32, i32) {
    %c0_i32 = arith.constant 0 : i32
    %c0_i32_0 = arith.constant 0 : i32
    return %c0_i32, %arg0 : i32, i32
  }
}

</mosaic_0001>

<llo_original>
// kernel: squeeze.6
$region0: #{squeeze.6}
  %s0 = inlined_call_operand.vmem [shape: f32[16016], index: 0, kind: input, shape index: {}]
  %s1 = inlined_call_operand.vmem [shape: f32[1001,16], index: 1, kind: output, shape index: {}]
  %v2 = vld [vmem:[%s0] sm:$0xff]
  %vm3 = vcmask 130048
  %4 = vst.msk [vmem:[%s1] ss:$8 sm:$0xf] %vm3, %v2
  %5 = vst.msk [vmem:[%s1] ss:$8 sm:$0xf0] %vm3, %v2
  %s6 = scalar_lea.vmem %s0, 8
  %v7 = vld [vmem:[%s6] sm:$0xff]
  %vm8 = vcmask 130048
  %s9 = scalar_lea.vmem %s1, 64
  %10 = vst.msk [vmem:[%s9] ss:$8 sm:$0xf] %vm8, %v7
  %s11 = scalar_lea.vmem %s1, 64
  %12 = vst.msk [vmem:[%s11] ss:$8 sm:$0xf0] %vm8, %v7
  %s13 = scalar_lea.vmem %s0, 16
  %v14 = vld [vmem:[%s13] sm:$0xff]
  %vm15 = vcmask 130048
  %s16 = scalar_lea.vmem %s1, 128
  %17 = vst.msk [vmem:[%s16] ss:$8 sm:$0xf] %vm15, %v14
  %s18 = scalar_lea.vmem %s1, 128
  %19 = vst.msk [vmem:[%s18] ss:$8 sm:$0xf0] %vm15, %v14
  %s20 = scalar_lea.vmem %s0, 24
  %v21 = vld [vmem:[%s20] sm:$0xff]
  %vm22 = vcmask 130048
  %s23 = scalar_lea.vmem %s1, 192
  %24 = vst.msk [vmem:[%s23] ss:$8 sm:$0xf] %vm22, %v21
  %s25 = scalar_lea.vmem %s1, 192
  %26 = vst.msk [vmem:[%s25] ss:$8 sm:$0xf0] %vm22, %v21
  %s27 = scalar_lea.vmem %s0, 32
  %v28 = vld [vmem:[%s27] sm:$0xff]
  %vm29 = vcmask 130048
  %s30 = scalar_lea.vmem %s1, 256
  %31 = vst.msk [vmem:[%s30] ss:$8 sm:$0xf] %vm29, %v28
  %s32 = scalar_lea.vmem %s1, 256
  %33 = vst.msk [vmem:[%s32] ss:$8 sm:$0xf0] %vm29, %v28
  %s34 = scalar_lea.vmem %s0, 40
  %v35 = vld [vmem:[%s34] sm:$0xff]
  %vm36 = vcmask 130048
  %s37 = scalar_lea.vmem %s1, 320
  %38 = vst.msk [vmem:[%s37] ss:$8 sm:$0xf] %vm36, %v35
  %s39 = scalar_lea.vmem %s1, 320
  %40 = vst.msk [vmem:[%s39] ss:$8 sm:$0xf0] %vm36, %v35
  %s41 = scalar_lea.vmem %s0, 48
  %v42 = vld [vmem:[%s41] sm:$0xff]
  %vm43 = vcmask 130048
  %s44 = scalar_lea.vmem %s1, 384
  %45 = vst.msk [vmem:[%s44] ss:$8 sm:$0xf] %vm43, %v42
  %s46 = scalar_lea.vmem %s1, 384
  %47 = vst.msk [vmem:[%s46] ss:$8 sm:$0xf0] %vm43, %v42
  %s48 = scalar_lea.vmem %s0, 56
  %v49 = vld [vmem:[%s48] sm:$0xff]
  %vm50 = vcmask 130048
  %s51 = scalar_lea.vmem %s1, 448
  %52 = vst.msk [vmem:[%s51] ss:$8 sm:$0xf] %vm50, %v49
  %s53 = scalar_lea.vmem %s1, 448
  %54 = vst.msk [vmem:[%s53] ss:$8 sm:$0xf0] %vm50, %v49
  %s55 = scalar_lea.vmem %s0, 64
  %v56 = vld [vmem:[%s55] sm:$0xff]
  %vm57 = vcmask 130048
  %s58 = scalar_lea.vmem %s1, 512
  %59 = vst.msk [vmem:[%s58] ss:$8 sm:$0xf] %vm57, %v56
  %s60 = scalar_lea.vmem %s1, 512
  %61 = vst.msk [vmem:[%s60] ss:$8 sm:$0xf0] %vm57, %v56
  %s62 = scalar_lea.vmem %s0, 72
  %v63 = vld [vmem:[%s62] sm:$0xff]
  %vm64 = vcmask 130048
  %s65 = scalar_lea.vmem %s1, 576
  %66 = vst.msk [vmem:[%s65] ss:$8 sm:$0xf] %vm64, %v63
  %s67 = scalar_lea.vmem %s1, 576
  %68 = vst.msk [vmem:[%s67] ss:$8 sm:$0xf0] %vm64, %v63
  %s69 = scalar_lea.vmem %s0, 80
  %v70 = vld [vmem:[%s69] sm:$0xff]
  %vm71 = vcmask 130048
  %s72 = scalar_lea.vmem %s1, 640
  %73 = vst.msk [vmem:[%s72] ss:$8 sm:$0xf] %vm71, %v70
  %s74 = scalar_lea.vmem %s1, 640
  %75 = vst.msk [vmem:[%s74] ss:$8 sm:$0xf0] %vm71, %v70
  %s76 = scalar_lea.vmem %s0, 88
  %v77 = vld [vmem:[%s76] sm:$0xff]
  %vm78 = vcmask 130048
  %s79 = scalar_lea.vmem %s1, 704
  %80 = vst.msk [vmem:[%s79] ss:$8 sm:$0xf] %vm78, %v77
  %s81 = scalar_lea.vmem %s1, 704
  %82 = vst.msk [vmem:[%s81] ss:$8 sm:$0xf0] %vm78, %v77
  %s83 = scalar_lea.vmem %s0, 96
  %v84 = vld [vmem:[%s83] sm:$0xff]
  %vm85 = vcmask 130048
  %s86 = scalar_lea.vmem %s1, 768
  %87 = vst.msk [vmem:[%s86] ss:$8 sm:$0xf] %vm85, %v84
  %s88 = scalar_lea.vmem %s1, 768
  %89 = vst.msk [vmem:[%s88] ss:$8 sm:$0xf0] %vm85, %v84
  %s90 = scalar_lea.vmem %s0, 104
  %v91 = vld [vmem:[%s90] sm:$0xff]
  %vm92 = vcmask 130048
  %s93 = scalar_lea.vmem %s1, 832
  %94 = vst.msk [vmem:[%s93] ss:$8 sm:$0xf] %vm92, %v91
  %s95 = scalar_lea.vmem %s1, 832
  %96 = vst.msk [vmem:[%s95] ss:$8 sm:$0xf0] %vm92, %v91
  %s97 = scalar_lea.vmem %s0, 112
  %v98 = vld [vmem:[%s97] sm:$0xff]
  %vm99 = vcmask 130048
  %s100 = scalar_lea.vmem %s1, 896
  %101 = vst.msk [vmem:[%s100] ss:$8 sm:$0xf] %vm99, %v98
  %s102 = scalar_lea.vmem %s1, 896
  %103 = vst.msk [vmem:[%s102] ss:$8 sm:$0xf0] %vm99, %v98
  %s104 = scalar_lea.vmem %s0, 120
  %v105 = vld [vmem:[%s104] sm:$0x3f]
  %vm106 = vcmask 130048
  %s107 = scalar_lea.vmem %s1, 960
  %108 = vst.msk [vmem:[%s107] ss:$8 sm:$0xf] %vm106, %v105
  %s109 = scalar_lea.vmem %s1, 960
  %110 = vst.msk [vmem:[%s109] ss:$8 sm:$0x30] %vm106, %v105
  %v111 = vld [vmem:[%s0] sm:$0xff]
  %112 = vrot.lane.b32.xlu0 %v111, 112
  %v113 = vpop.permute.xlu0 %112
  %vm114 = vcmask 130048
  %s115 = scalar_lea.vmem %s1, 1
  %116 = vst.msk [vmem:[%s115] ss:$8 sm:$0xf] %vm114, %v113
  %s117 = scalar_lea.vmem %s1, 1
  %118 = vst.msk [vmem:[%s117] ss:$8 sm:$0xf0] %vm114, %v113
  %s119 = scalar_lea.vmem %s0, 8
  %v120 = vld [vmem:[%s119] sm:$0xff]
  %121 = vrot.lane.b32.xlu0 %v120, 112
  %v122 = vpop.permute.xlu0 %121
  %vm123 = vcmask 130048
  %s124 = scalar_lea.vmem %s1, 65
  %125 = vst.msk [vmem:[%s124] ss:$8 sm:$0xf] %vm123, %v122
  %s126 = scalar_lea.vmem %s1, 65
  %127 = vst.msk [vmem:[%s126] ss:$8 sm:$0xf0] %vm123, %v122
  %s128 = scalar_lea.vmem %s0, 16
  %v129 = vld [vmem:[%s128] sm:$0xff]
  %130 = vrot.lane.b32.xlu0 %v129, 112
  %v131 = vpop.permute.xlu0 %130
  %vm132 = vcmask 130048
  %s133 = scalar_lea.vmem %s1, 129
  %134 = vst.msk [vmem:[%s133] ss:$8 sm:$0xf] %vm132, %v131
  %s135 = scalar_lea.vmem %s1, 129
  %136 = vst.msk [vmem:[%s135] ss:$8 sm:$0xf0] %vm132, %v131
  %s137 = scalar_lea.vmem %s0, 24
  %v138 = vld [vmem:[%s137] sm:$0xff]
  %139 = vrot.lane.b32.xlu0 %v138, 112
  %v140 = vpop.permute.xlu0 %139
  %vm141 = vcmask 130048
  %s142 = scalar_lea.vmem %s1, 193
  %143 = vst.msk [vmem:[%s142] ss:$8 sm:$0xf] %vm141, %v140
  %s144 = scalar_lea.vmem %s1, 193
  %145 = vst.msk [vmem:[%s144] ss:$8 sm:$0xf0] %vm141, %v140
  %s146 = scalar_lea.vmem %s0, 32
  %v147 = vld [vmem:[%s146] sm:$0xff]
  %148 = vrot.lane.b32.xlu0 %v147, 112
  %v149 = vpop.permute.xlu0 %148
  %vm150 = vcmask 130048
  %s151 = scalar_lea.vmem %s1, 257
  %152 = vst.msk [vmem:[%s151] ss:$8 sm:$0xf] %vm150, %v149
  %s153 = scalar_lea.vmem %s1, 257
  %154 = vst.msk [vmem:[%s153] ss:$8 sm:$0xf0] %vm150, %v149
  %s155 = scalar_lea.vmem %s0, 40
  %v156 = vld [vmem:[%s155] sm:$0xff]
  %157 = vrot.lane.b32.xlu0 %v156, 112
  %v158 = vpop.permute.xlu0 %157
  %vm159 = vcmask 130048
  %s160 = scalar_lea.vmem %s1, 321
  %161 = vst.msk [vmem:[%s160] ss:$8 sm:$0xf] %vm159, %v158
  %s162 = scalar_lea.vmem %s1, 321
  %163 = vst.msk [vmem:[%s162] ss:$8 sm:$0xf0] %vm159, %v158
  %s164 = scalar_lea.vmem %s0, 48
  %v165 = vld [vmem:[%s164] sm:$0xff]
  %166 = vrot.lane.b32.xlu0 %v165, 112
  %v167 = vpop.permute.xlu0 %166
  %vm168 = vcmask 130048
  %s169 = scalar_lea.vmem %s1, 385
  %170 = vst.msk [vmem:[%s169] ss:$8 sm:$0xf] %vm168, %v167
  %s171 = scalar_lea.vmem %s1, 385
  %172 = vst.msk [vmem:[%s171] ss:$8 sm:$0xf0] %vm168, %v167
  %s173 = scalar_lea.vmem %s0, 56
  %v174 = vld [vmem:[%s173] sm:$0xff]
  %175 = vrot.lane.b32.xlu0 %v174, 112
  %v176 = vpop.permute.xlu0 %175
  %vm177 = vcmask 130048
  %s178 = scalar_lea.vmem %s1, 449
  %179 = vst.msk [vmem:[%s178] ss:$8 sm:$0xf] %vm177, %v176
  %s180 = scalar_lea.vmem %s1, 449
  %181 = vst.msk [vmem:[%s180] ss:$8 sm:$0xf0] %vm177, %v176
  %s182 = scalar_lea.vmem %s0, 64
  %v183 = vld [vmem:[%s182] sm:$0xff]
  %184 = vrot.lane.b32.xlu0 %v183, 112
  %v185 = vpop.permute.xlu0 %184
  %vm186 = vcmask 130048
  %s187 = scalar_lea.vmem %s1, 513
  %188 = vst.msk [vmem:[%s187] ss:$8 sm:$0xf] %vm186, %v185
  %s189 = scalar_lea.vmem %s1, 513
  %190 = vst.msk [vmem:[%s189] ss:$8 sm:$0xf0] %vm186, %v185
  %s191 = scalar_lea.vmem %s0, 72
  %v192 = vld [vmem:[%s191] sm:$0xff]
  %193 = vrot.lane.b32.xlu0 %v192, 112
  %v194 = vpop.permute.xlu0 %193
  %vm195 = vcmask 130048
  %s196 = scalar_lea.vmem %s1, 577
  %197 = vst.msk [vmem:[%s196] ss:$8 sm:$0xf] %vm195, %v194
  %s198 = scalar_lea.vmem %s1, 577
  %199 = vst.msk [vmem:[%s198] ss:$8 sm:$0xf0] %vm195, %v194
  %s200 = scalar_lea.vmem %s0, 80
  %v201 = vld [vmem:[%s200] sm:$0xff]
  %202 = vrot.lane.b32.xlu0 %v201, 112
  %v203 = vpop.permute.xlu0 %202
  %vm204 = vcmask 130048
  %s205 = scalar_lea.vmem %s1, 641
  %206 = vst.msk [vmem:[%s205] ss:$8 sm:$0xf] %vm204, %v203
  %s207 = scalar_lea.vmem %s1, 641
  %208 = vst.msk [vmem:[%s207] ss:$8 sm:$0xf0] %vm204, %v203
  %s209 = scalar_lea.vmem %s0, 88
  %v210 = vld [vmem:[%s209] sm:$0xff]
  %211 = vrot.lane.b32.xlu0 %v210, 112
  %v212 = vpop.permute.xlu0 %211
  %vm213 = vcmask 130048
  %s214 = scalar_lea.vmem %s1, 705
  %215 = vst.msk [vmem:[%s214] ss:$8 sm:$0xf] %vm213, %v212
  %s216 = scalar_lea.vmem %s1, 705
  %217 = vst.msk [vmem:[%s216] ss:$8 sm:$0xf0] %vm213, %v212
  %s218 = scalar_lea.vmem %s0, 96
  %v219 = vld [vmem:[%s218] sm:$0xff]
  %220 = vrot.lane.b32.xlu0 %v219, 112
  %v221 = vpop.permute.xlu0 %220
  %vm222 = vcmask 130048
  %s223 = scalar_lea.vmem %s1, 769
  %224 = vst.msk [vmem:[%s223] ss:$8 sm:$0xf] %vm222, %v221
  %s225 = scalar_lea.vmem %s1, 769
  %226 = vst.msk [vmem:[%s225] ss:$8 sm:$0xf0] %vm222, %v221
  %s227 = scalar_lea.vmem %s0, 104
  %v228 = vld [vmem:[%s227] sm:$0xff]
  %229 = vrot.lane.b32.xlu0 %v228, 112
  %v230 = vpop.permute.xlu0 %229
  %vm231 = vcmask 130048
  %s232 = scalar_lea.vmem %s1, 833
  %233 = vst.msk [vmem:[%s232] ss:$8 sm:$0xf] %vm231, %v230
  %s234 = scalar_lea.vmem %s1, 833
  %235 = vst.msk [vmem:[%s234] ss:$8 sm:$0xf0] %vm231, %v230
  %s236 = scalar_lea.vmem %s0, 112
  %v237 = vld [vmem:[%s236] sm:$0xff]
  %238 = vrot.lane.b32.xlu0 %v237, 112
  %v239 = vpop.permute.xlu0 %238
  %vm240 = vcmask 130048
  %s241 = scalar_lea.vmem %s1, 897
  %242 = vst.msk [vmem:[%s241] ss:$8 sm:$0xf] %vm240, %v239
  %s243 = scalar_lea.vmem %s1, 897
  %244 = vst.msk [vmem:[%s243] ss:$8 sm:$0xf0] %vm240, %v239
  %s245 = scalar_lea.vmem %s0, 120
  %v246 = vld [vmem:[%s245] sm:$0x1f]
  %247 = vrot.lane.b32.xlu0 %v246, 112
  %v248 = vpop.permute.xlu0 %247
  %vm249 = vcmask 130048
  %s250 = scalar_lea.vmem %s1, 961
  %251 = vst.msk [vmem:[%s250] ss:$8 sm:$0xf] %vm249, %v248
  %s252 = scalar_lea.vmem %s1, 989
  %253 = vst.msk [vmem:[%s252] sm:$0x10] %vm249, %v248
  %v254 = vld [vmem:[%s0] sm:$0xff]
  %255 = vrot.lane.b32.xlu0 %v254, 96
  %v256 = vpop.permute.xlu0 %255
  %vm257 = vcmask 130048
  %s258 = scalar_lea.vmem %s1, 2
  %259 = vst.msk [vmem:[%s258] ss:$8 sm:$0xf] %vm257, %v256
  %s260 = scalar_lea.vmem %s1, 2
  %261 = vst.msk [vmem:[%s260] ss:$8 sm:$0xf0] %vm257, %v256
  %s262 = scalar_lea.vmem %s0, 8
  %v263 = vld [vmem:[%s262] sm:$0xff]
  %264 = vrot.lane.b32.xlu0 %v263, 96
  %v265 = vpop.permute.xlu0 %264
  %vm266 = vcmask 130048
  %s267 = scalar_lea.vmem %s1, 66
  %268 = vst.msk [vmem:[%s267] ss:$8 sm:$0xf] %vm266, %v265
  %s269 = scalar_lea.vmem %s1, 66
  %270 = vst.msk [vmem:[%s269] ss:$8 sm:$0xf0] %vm266, %v265
  %s271 = scalar_lea.vmem %s0, 16
  %v272 = vld [vmem:[%s271] sm:$0xff]
  %273 = vrot.lane.b32.xlu0 %v272, 96
  %v274 = vpop.permute.xlu0 %273
  %vm275 = vcmask 130048
  %s276 = scalar_lea.vmem %s1, 130
  %277 = vst.msk [vmem:[%s276] ss:$8 sm:$0xf] %vm275, %v274
  %s278 = scalar_lea.vmem %s1, 130
  %279 = vst.msk [vmem:[%s278] ss:$8 sm:$0xf0] %vm275, %v274
  %s280 = scalar_lea.vmem %s0, 24
  %v281 = vld [vmem:[%s280] sm:$0xff]
  %282 = vrot.lane.b32.xlu0 %v281, 96
  %v283 = vpop.permute.xlu0 %282
  %vm284 = vcmask 130048
  %s285 = scalar_lea.vmem %s1, 194
  %286 = vst.msk [vmem:[%s285] ss:$8 sm:$0xf] %vm284, %v283
  %s287 = scalar_lea.vmem %s1, 194
  %288 = vst.msk [vmem:[%s287] ss:$8 sm:$0xf0] %vm284, %v283
  %s289 = scalar_lea.vmem %s0, 32
  %v290 = vld [vmem:[%s289] sm:$0xff]
  %291 = vrot.lane.b32.xlu0 %v290, 96
  %v292 = vpop.permute.xlu0 %291
  %vm293 = vcmask 130048
  %s294 = scalar_lea.vmem %s1, 258
  %295 = vst.msk [vmem:[%s294] ss:$8 sm:$0xf] %vm293, %v292
  %s296 = scalar_lea.vmem %s1, 258
  %297 = vst.msk [vmem:[%s296] ss:$8 sm:$0xf0] %vm293, %v292
  %s298 = scalar_lea.vmem %s0, 40
  %v299 = vld [vmem:[%s298] sm:$0xff]
  %300 = vrot.lane.b32.xlu0 %v299, 96
  %v301 = vpop.permute.xlu0 %300
  %vm302 = vcmask 130048
  %s303 = scalar_lea.vmem %s1, 322
  %304 = vst.msk [vmem:[%s303] ss:$8 sm:$0xf] %vm302, %v301
  %s305 = scalar_lea.vmem %s1, 322
  %306 = vst.msk [vmem:[%s305] ss:$8 sm:$0xf0] %vm302, %v301
  %s307 = scalar_lea.vmem %s0, 48
  %v308 = vld [vmem:[%s307] sm:$0xff]
  %309 = vrot.lane.b32.xlu0 %v308, 96
  %v310 = vpop.permute.xlu0 %309
  %vm311 = vcmask 130048
  %s312 = scalar_lea.vmem %s1, 386
  %313 = vst.msk [vmem:[%s312] ss:$8 sm:$0xf] %vm311, %v310
  %s314 = scalar_lea.vmem %s1, 386
  %315 = vst.msk [vmem:[%s314] ss:$8 sm:$0xf0] %vm311, %v310
  %s316 = scalar_lea.vmem %s0, 56
  %v317 = vld [vmem:[%s316] sm:$0xff]
  %318 = vrot.lane.b32.xlu0 %v317, 96
  %v319 = vpop.permute.xlu0 %318
  %vm320 = vcmask 130048
  %s321 = scalar_lea.vmem %s1, 450
  %322 = vst.msk [vmem:[%s321] ss:$8 sm:$0xf] %vm320, %v319
  %s323 = scalar_lea.vmem %s1, 450
  %324 = vst.msk [vmem:[%s323] ss:$8 sm:$0xf0] %vm320, %v319
  %s325 = scalar_lea.vmem %s0, 64
  %v326 = vld [vmem:[%s325] sm:$0xff]
  %327 = vrot.lane.b32.xlu0 %v326, 96
  %v328 = vpop.permute.xlu0 %327
  %vm329 = vcmask 130048
  %s330 = scalar_lea.vmem %s1, 514
  %331 = vst.msk [vmem:[%s330] ss:$8 sm:$0xf] %vm329, %v328
  %s332 = scalar_lea.vmem %s1, 514
  %333 = vst.msk [vmem:[%s332] ss:$8 sm:$0xf0] %vm329, %v328
  %s334 = scalar_lea.vmem %s0, 72
  %v335 = vld [vmem:[%s334] sm:$0xff]
  %336 = vrot.lane.b32.xlu0 %v335, 96
  %v337 = vpop.permute.xlu0 %336
  %vm338 = vcmask 130048
  %s339 = scalar_lea.vmem %s1, 578
  %340 = vst.msk [vmem:[%s339] ss:$8 sm:$0xf] %vm338, %v337
  %s341 = scalar_lea.vmem %s1, 578
  %342 = vst.msk [vmem:[%s341] ss:$8 sm:$0xf0] %vm338, %v337
  %s343 = scalar_lea.vmem %s0, 80
  %v344 = vld [vmem:[%s343] sm:$0xff]
  %345 = vrot.lane.b32.xlu0 %v344, 96
  %v346 = vpop.permute.xlu0 %345
  %vm347 = vcmask 130048
  %s348 = scalar_lea.vmem %s1, 642
  %349 = vst.msk [vmem:[%s348] ss:$8 sm:$0xf] %vm347, %v346
  %s350 = scalar_lea.vmem %s1, 642
  %351 = vst.msk [vmem:[%s350] ss:$8 sm:$0xf0] %vm347, %v346
  %s352 = scalar_lea.vmem %s0, 88
  %v353 = vld [vmem:[%s352] sm:$0xff]
  %354 = vrot.lane.b32.xlu0 %v353, 96
  %v355 = vpop.permute.xlu0 %354
  %vm356 = vcmask 130048
  %s357 = scalar_lea.vmem %s1, 706
  %358 = vst.msk [vmem:[%s357] ss:$8 sm:$0xf] %vm356, %v355
  %s359 = scalar_lea.vmem %s1, 706
  %360 = vst.msk [vmem:[%s359] ss:$8 sm:$0xf0] %vm356, %v355
  %s361 = scalar_lea.vmem %s0, 96
  %v362 = vld [vmem:[%s361] sm:$0xff]
  %363 = vrot.lane.b32.xlu0 %v362, 96
  %v364 = vpop.permute.xlu0 %363
  %vm365 = vcmask 130048
  %s366 = scalar_lea.vmem %s1, 770
  %367 = vst.msk [vmem:[%s366] ss:$8 sm:$0xf] %vm365, %v364
  %s368 = scalar_lea.vmem %s1, 770
  %369 = vst.msk [vmem:[%s368] ss:$8 sm:$0xf0] %vm365, %v364
  %s370 = scalar_lea.vmem %s0, 104
  %v371 = vld [vmem:[%s370] sm:$0xff]
  %372 = vrot.lane.b32.xlu0 %v371, 96
  %v373 = vpop.permute.xlu0 %372
  %vm374 = vcmask 130048
  %s375 = scalar_lea.vmem %s1, 834
  %376 = vst.msk [vmem:[%s375] ss:$8 sm:$0xf] %vm374, %v373
  %s377 = scalar_lea.vmem %s1, 834
  %378 = vst.msk [vmem:[%s377] ss:$8 sm:$0xf0] %vm374, %v373
  %s379 = scalar_lea.vmem %s0, 112
  %v380 = vld [vmem:[%s379] sm:$0xff]
  %381 = vrot.lane.b32.xlu0 %v380, 96
  %v382 = vpop.permute.xlu0 %381
  %vm383 = vcmask 130048
  %s384 = scalar_lea.vmem %s1, 898
  %385 = vst.msk [vmem:[%s384] ss:$8 sm:$0xf] %vm383, %v382
  %s386 = scalar_lea.vmem %s1, 898
  %387 = vst.msk [vmem:[%s386] ss:$8 sm:$0xf0] %vm383, %v382
  %s388 = scalar_lea.vmem %s0, 120
  %v389 = vld [vmem:[%s388] sm:$0x1f]
  %390 = vrot.lane.b32.xlu0 %v389, 96
  %v391 = vpop.permute.xlu0 %390
  %vm392 = vcmask 130048
  %s393 = scalar_lea.vmem %s1, 962
  %394 = vst.msk [vmem:[%s393] ss:$8 sm:$0xf] %vm392, %v391
  %s395 = scalar_lea.vmem %s1, 990
  %396 = vst.msk [vmem:[%s395] sm:$0x10] %vm392, %v391
  %v397 = vld [vmem:[%s0] sm:$0xff]
  %398 = vrot.lane.b32.xlu0 %v397, 80
  %v399 = vpop.permute.xlu0 %398
  %vm400 = vcmask 130048
  %s401 = scalar_lea.vmem %s1, 3
  %402 = vst.msk [vmem:[%s401] ss:$8 sm:$0xf] %vm400, %v399
  %s403 = scalar_lea.vmem %s1, 3
  %404 = vst.msk [vmem:[%s403] ss:$8 sm:$0xf0] %vm400, %v399
  %s405 = scalar_lea.vmem %s0, 8
  %v406 = vld [vmem:[%s405] sm:$0xff]
  %407 = vrot.lane.b32.xlu0 %v406, 80
  %v408 = vpop.permute.xlu0 %407
  %vm409 = vcmask 130048
  %s410 = scalar_lea.vmem %s1, 67
  %411 = vst.msk [vmem:[%s410] ss:$8 sm:$0xf] %vm409, %v408
  %s412 = scalar_lea.vmem %s1, 67
  %413 = vst.msk [vmem:[%s412] ss:$8 sm:$0xf0] %vm409, %v408
  %s414 = scalar_lea.vmem %s0, 16
  %v415 = vld [vmem:[%s414] sm:$0xff]
  %416 = vrot.lane.b32.xlu0 %v415, 80
  %v417 = vpop.permute.xlu0 %416
  %vm418 = vcmask 130048
  %s419 = scalar_lea.vmem %s1, 131
  %420 = vst.msk [vmem:[%s419] ss:$8 sm:$0xf] %vm418, %v417
  %s421 = scalar_lea.vmem %s1, 131
  %422 = vst.msk [vmem:[%s421] ss:$8 sm:$0xf0] %vm418, %v417
  %s423 = scalar_lea.vmem %s0, 24
  %v424 = vld [vmem:[%s423] sm:$0xff]
  %425 = vrot.lane.b32.xlu0 %v424, 80
  %v426 = vpop.permute.xlu0 %425
  %vm427 = vcmask 130048
  %s428 = scalar_lea.vmem %s1, 195
  %429 = vst.msk [vmem:[%s428] ss:$8 sm:$0xf] %vm427, %v426
  %s430 = scalar_lea.vmem %s1, 195
  %431 = vst.msk [vmem:[%s430] ss:$8 sm:$0xf0] %vm427, %v426
  %s432 = scalar_lea.vmem %s0, 32
  %v433 = vld [vmem:[%s432] sm:$0xff]
  %434 = vrot.lane.b32.xlu0 %v433, 80
  %v435 = vpop.permute.xlu0 %434
  %vm436 = vcmask 130048
  %s437 = scalar_lea.vmem %s1, 259
  %438 = vst.msk [vmem:[%s437] ss:$8 sm:$0xf] %vm436, %v435
  %s439 = scalar_lea.vmem %s1, 259
  %440 = vst.msk [vmem:[%s439] ss:$8 sm:$0xf0] %vm436, %v435
  %s441 = scalar_lea.vmem %s0, 40
  %v442 = vld [vmem:[%s441] sm:$0xff]
  %443 = vrot.lane.b32.xlu0 %v442, 80
  %v444 = vpop.permute.xlu0 %443
  %vm445 = vcmask 130048
  %s446 = scalar_lea.vmem %s1, 323
  %447 = vst.msk [vmem:[%s446] ss:$8 sm:$0xf] %vm445, %v444
  %s448 = scalar_lea.vmem %s1, 323
  %449 = vst.msk [vmem:[%s448] ss:$8 sm:$0xf0] %vm445, %v444
  %s450 = scalar_lea.vmem %s0, 48
  %v451 = vld [vmem:[%s450] sm:$0xff]
  %452 = vrot.lane.b32.xlu0 %v451, 80
  %v453 = vpop.permute.xlu0 %452
  %vm454 = vcmask 130048
  %s455 = scalar_lea.vmem %s1, 387
  %456 = vst.msk [vmem:[%s455] ss:$8 sm:$0xf] %vm454, %v453
  %s457 = scalar_lea.vmem %s1, 387
  %458 = vst.msk [vmem:[%s457] ss:$8 sm:$0xf0] %vm454, %v453
  %s459 = scalar_lea.vmem %s0, 56
  %v460 = vld [vmem:[%s459] sm:$0xff]
  %461 = vrot.lane.b32.xlu0 %v460, 80
  %v462 = vpop.permute.xlu0 %461
  %vm463 = vcmask 130048
  %s464 = scalar_lea.vmem %s1, 451
  %465 = vst.msk [vmem:[%s464] ss:$8 sm:$0xf] %vm463, %v462
  %s466 = scalar_lea.vmem %s1, 451
  %467 = vst.msk [vmem:[%s466] ss:$8 sm:$0xf0] %vm463, %v462
  %s468 = scalar_lea.vmem %s0, 64
  %v469 = vld [vmem:[%s468] sm:$0xff]
  %470 = vrot.lane.b32.xlu0 %v469, 80
  %v471 = vpop.permute.xlu0 %470
  %vm472 = vcmask 130048
  %s473 = scalar_lea.vmem %s1, 515
  %474 = vst.msk [vmem:[%s473] ss:$8 sm:$0xf] %vm472, %v471
  %s475 = scalar_lea.vmem %s1, 515
  %476 = vst.msk [vmem:[%s475] ss:$8 sm:$0xf0] %vm472, %v471
  %s477 = scalar_lea.vmem %s0, 72
  %v478 = vld [vmem:[%s477] sm:$0xff]
  %479 = vrot.lane.b32.xlu0 %v478, 80
  %v480 = vpop.permute.xlu0 %479
  %vm481 = vcmask 130048
  %s482 = scalar_lea.vmem %s1, 579
  %483 = vst.msk [vmem:[%s482] ss:$8 sm:$0xf] %vm481, %v480
  %s484 = scalar_lea.vmem %s1, 579
  %485 = vst.msk [vmem:[%s484] ss:$8 sm:$0xf0] %vm481, %v480
  %s486 = scalar_lea.vmem %s0, 80
  %v487 = vld [vmem:[%s486] sm:$0xff]
  %488 = vrot.lane.b32.xlu0 %v487, 80
  %v489 = vpop.permute.xlu0 %488
  %vm490 = vcmask 130048
  %s491 = scalar_lea.vmem %s1, 643
  %492 = vst.msk [vmem:[%s491] ss:$8 sm:$0xf] %vm490, %v489
  %s493 = scalar_lea.vmem %s1, 643
  %494 = vst.msk [vmem:[%s493] ss:$8 sm:$0xf0] %vm490, %v489
  %s495 = scalar_lea.vmem %s0, 88
  %v496 = vld [vmem:[%s495] sm:$0xff]
  %497 = vrot.lane.b32.xlu0 %v496, 80
  %v498 = vpop.permute.xlu0 %497
  %vm499 = vcmask 130048
  %s500 = scalar_lea.vmem %s1, 707
  %501 = vst.msk [vmem:[%s500] ss:$8 sm:$0xf] %vm499, %v498
  %s502 = scalar_lea.vmem %s1, 707
  %503 = vst.msk [vmem:[%s502] ss:$8 sm:$0xf0] %vm499, %v498
  %s504 = scalar_lea.vmem %s0, 96
  %v505 = vld [vmem:[%s504] sm:$0xff]
  %506 = vrot.lane.b32.xlu0 %v505, 80
  %v507 = vpop.permute.xlu0 %506
  %vm508 = vcmask 130048
  %s509 = scalar_lea.vmem %s1, 771
  %510 = vst.msk [vmem:[%s509] ss:$8 sm:$0xf] %vm508, %v507
  %s511 = scalar_lea.vmem %s1, 771
  %512 = vst.msk [vmem:[%s511] ss:$8 sm:$0xf0] %vm508, %v507
  %s513 = scalar_lea.vmem %s0, 104
  %v514 = vld [vmem:[%s513] sm:$0xff]
  %515 = vrot.lane.b32.xlu0 %v514, 80
  %v516 = vpop.permute.xlu0 %515
  %vm517 = vcmask 130048
  %s518 = scalar_lea.vmem %s1, 835
  %519 = vst.msk [vmem:[%s518] ss:$8 sm:$0xf] %vm517, %v516
  %s520 = scalar_lea.vmem %s1, 835
  %521 = vst.msk [vmem:[%s520] ss:$8 sm:$0xf0] %vm517, %v516
  %s522 = scalar_lea.vmem %s0, 112
  %v523 = vld [vmem:[%s522] sm:$0xff]
  %524 = vrot.lane.b32.xlu0 %v523, 80
  %v525 = vpop.permute.xlu0 %524
  %vm526 = vcmask 130048
  %s527 = scalar_lea.vmem %s1, 899
  %528 = vst.msk [vmem:[%s527] ss:$8 sm:$0xf] %vm526, %v525
  %s529 = scalar_lea.vmem %s1, 899
  %530 = vst.msk [vmem:[%s529] ss:$8 sm:$0xf0] %vm526, %v525
  %s531 = scalar_lea.vmem %s0, 120
  %v532 = vld [vmem:[%s531] sm:$0x1f]
  %533 = vrot.lane.b32.xlu0 %v532, 80
  %v534 = vpop.permute.xlu0 %533
  %vm535 = vcmask 130048
  %s536 = scalar_lea.vmem %s1, 963
  %537 = vst.msk [vmem:[%s536] ss:$8 sm:$0xf] %vm535, %v534
  %s538 = scalar_lea.vmem %s1, 991
  %539 = vst.msk [vmem:[%s538] sm:$0x10] %vm535, %v534
  %v540 = vld [vmem:[%s0] sm:$0xff]
  %541 = vrot.lane.b32.xlu0 %v540, 64
  %v542 = vpop.permute.xlu0 %541
  %vm543 = vcmask 130048
  %s544 = scalar_lea.vmem %s1, 4
  %545 = vst.msk [vmem:[%s544] ss:$8 sm:$0xf] %vm543, %v542
  %s546 = scalar_lea.vmem %s1, 4
  %547 = vst.msk [vmem:[%s546] ss:$8 sm:$0xf0] %vm543, %v542
  %s548 = scalar_lea.vmem %s0, 8
  %v549 = vld [vmem:[%s548] sm:$0xff]
  %550 = vrot.lane.b32.xlu0 %v549, 64
  %v551 = vpop.permute.xlu0 %550
  %vm552 = vcmask 130048
  %s553 = scalar_lea.vmem %s1, 68
  %554 = vst.msk [vmem:[%s553] ss:$8 sm:$0xf] %vm552, %v551
  %s555 = scalar_lea.vmem %s1, 68
  %556 = vst.msk [vmem:[%s555] ss:$8 sm:$0xf0] %vm552, %v551
  %s557 = scalar_lea.vmem %s0, 16
  %v558 = vld [vmem:[%s557] sm:$0xff]
  %559 = vrot.lane.b32.xlu0 %v558, 64
  %v560 = vpop.permute.xlu0 %559
  %vm561 = vcmask 130048
  %s562 = scalar_lea.vmem %s1, 132
  %563 = vst.msk [vmem:[%s562] ss:$8 sm:$0xf] %vm561, %v560
  %s564 = scalar_lea.vmem %s1, 132
  %565 = vst.msk [vmem:[%s564] ss:$8 sm:$0xf0] %vm561, %v560
  %s566 = scalar_lea.vmem %s0, 24
  %v567 = vld [vmem:[%s566] sm:$0xff]
  %568 = vrot.lane.b32.xlu0 %v567, 64
  %v569 = vpop.permute.xlu0 %568
  %vm570 = vcmask 130048
  %s571 = scalar_lea.vmem %s1, 196
  %572 = vst.msk [vmem:[%s571] ss:$8 sm:$0xf] %vm570, %v569
  %s573 = scalar_lea.vmem %s1, 196
  %574 = vst.msk [vmem:[%s573] ss:$8 sm:$0xf0] %vm570, %v569
  %s575 = scalar_lea.vmem %s0, 32
  %v576 = vld [vmem:[%s575] sm:$0xff]
  %577 = vrot.lane.b32.xlu0 %v576, 64
  %v578 = vpop.permute.xlu0 %577
  %vm579 = vcmask 130048
  %s580 = scalar_lea.vmem %s1, 260
  %581 = vst.msk [vmem:[%s580] ss:$8 sm:$0xf] %vm579, %v578
  %s582 = scalar_lea.vmem %s1, 260
  %583 = vst.msk [vmem:[%s582] ss:$8 sm:$0xf0] %vm579, %v578
  %s584 = scalar_lea.vmem %s0, 40
  %v585 = vld [vmem:[%s584] sm:$0xff]
  %586 = vrot.lane.b32.xlu0 %v585, 64
  %v587 = vpop.permute.xlu0 %586
  %vm588 = vcmask 130048
  %s589 = scalar_lea.vmem %s1, 324
  %590 = vst.msk [vmem:[%s589] ss:$8 sm:$0xf] %vm588, %v587
  %s591 = scalar_lea.vmem %s1, 324
  %592 = vst.msk [vmem:[%s591] ss:$8 sm:$0xf0] %vm588, %v587
  %s593 = scalar_lea.vmem %s0, 48
  %v594 = vld [vmem:[%s593] sm:$0xff]
  %595 = vrot.lane.b32.xlu0 %v594, 64
  %v596 = vpop.permute.xlu0 %595
  %vm597 = vcmask 130048
  %s598 = scalar_lea.vmem %s1, 388
  %599 = vst.msk [vmem:[%s598] ss:$8 sm:$0xf] %vm597, %v596
  %s600 = scalar_lea.vmem %s1, 388
  %601 = vst.msk [vmem:[%s600] ss:$8 sm:$0xf0] %vm597, %v596
  %s602 = scalar_lea.vmem %s0, 56
  %v603 = vld [vmem:[%s602] sm:$0xff]
  %604 = vrot.lane.b32.xlu0 %v603, 64
  %v605 = vpop.permute.xlu0 %604
  %vm606 = vcmask 130048
  %s607 = scalar_lea.vmem %s1, 452
  %608 = vst.msk [vmem:[%s607] ss:$8 sm:$0xf] %vm606, %v605
  %s609 = scalar_lea.vmem %s1, 452
  %610 = vst.msk [vmem:[%s609] ss:$8 sm:$0xf0] %vm606, %v605
  %s611 = scalar_lea.vmem %s0, 64
  %v612 = vld [vmem:[%s611] sm:$0xff]
  %613 = vrot.lane.b32.xlu0 %v612, 64
  %v614 = vpop.permute.xlu0 %613
  %vm615 = vcmask 130048
  %s616 = scalar_lea.vmem %s1, 516
  %617 = vst.msk [vmem:[%s616] ss:$8 sm:$0xf] %vm615, %v614
  %s618 = scalar_lea.vmem %s1, 516
  %619 = vst.msk [vmem:[%s618] ss:$8 sm:$0xf0] %vm615, %v614
  %s620 = scalar_lea.vmem %s0, 72
  %v621 = vld [vmem:[%s620] sm:$0xff]
  %622 = vrot.lane.b32.xlu0 %v621, 64
  %v623 = vpop.permute.xlu0 %622
  %vm624 = vcmask 130048
  %s625 = scalar_lea.vmem %s1, 580
  %626 = vst.msk [vmem:[%s625] ss:$8 sm:$0xf] %vm624, %v623
  %s627 = scalar_lea.vmem %s1, 580
  %628 = vst.msk [vmem:[%s627] ss:$8 sm:$0xf0] %vm624, %v623
  %s629 = scalar_lea.vmem %s0, 80
  %v630 = vld [vmem:[%s629] sm:$0xff]
  %631 = vrot.lane.b32.xlu0 %v630, 64
  %v632 = vpop.permute.xlu0 %631
  %vm633 = vcmask 130048
  %s634 = scalar_lea.vmem %s1, 644
  %635 = vst.msk [vmem:[%s634] ss:$8 sm:$0xf] %vm633, %v632
  %s636 = scalar_lea.vmem %s1, 644
  %637 = vst.msk [vmem:[%s636] ss:$8 sm:$0xf0] %vm633, %v632
  %s638 = scalar_lea.vmem %s0, 88
  %v639 = vld [vmem:[%s638] sm:$0xff]
  %640 = vrot.lane.b32.xlu0 %v639, 64
  %v641 = vpop.permute.xlu0 %640
  %vm642 = vcmask 130048
  %s643 = scalar_lea.vmem %s1, 708
  %644 = vst.msk [vmem:[%s643] ss:$8 sm:$0xf] %vm642, %v641
  %s645 = scalar_lea.vmem %s1, 708
  %646 = vst.msk [vmem:[%s645] ss:$8 sm:$0xf0] %vm642, %v641
  %s647 = scalar_lea.vmem %s0, 96
  %v648 = vld [vmem:[%s647] sm:$0xff]
  %649 = vrot.lane.b32.xlu0 %v648, 64
  %v650 = vpop.permute.xlu0 %649
  %vm651 = vcmask 130048
  %s652 = scalar_lea.vmem %s1, 772
  %653 = vst.msk [vmem:[%s652] ss:$8 sm:$0xf] %vm651, %v650
  %s654 = scalar_lea.vmem %s1, 772
  %655 = vst.msk [vmem:[%s654] ss:$8 sm:$0xf0] %vm651, %v650
  %s656 = scalar_lea.vmem %s0, 104
  %v657 = vld [vmem:[%s656] sm:$0xff]
  %658 = vrot.lane.b32.xlu0 %v657, 64
  %v659 = vpop.permute.xlu0 %658
  %vm660 = vcmask 130048
  %s661 = scalar_lea.vmem %s1, 836
  %662 = vst.msk [vmem:[%s661] ss:$8 sm:$0xf] %vm660, %v659
  %s663 = scalar_lea.vmem %s1, 836
  %664 = vst.msk [vmem:[%s663] ss:$8 sm:$0xf0] %vm660, %v659
  %s665 = scalar_lea.vmem %s0, 112
  %v666 = vld [vmem:[%s665] sm:$0xff]
  %667 = vrot.lane.b32.xlu0 %v666, 64
  %v668 = vpop.permute.xlu0 %667
  %vm669 = vcmask 130048
  %s670 = scalar_lea.vmem %s1, 900
  %671 = vst.msk [vmem:[%s670] ss:$8 sm:$0xf] %vm669, %v668
  %s672 = scalar_lea.vmem %s1, 900
  %673 = vst.msk [vmem:[%s672] ss:$8 sm:$0xf0] %vm669, %v668
  %s674 = scalar_lea.vmem %s0, 120
  %v675 = vld [vmem:[%s674] sm:$0x1f]
  %676 = vrot.lane.b32.xlu0 %v675, 64
  %v677 = vpop.permute.xlu0 %676
  %vm678 = vcmask 130048
  %s679 = scalar_lea.vmem %s1, 964
  %680 = vst.msk [vmem:[%s679] ss:$8 sm:$0xf] %vm678, %v677
  %s681 = scalar_lea.vmem %s1, 992
  %682 = vst.msk [vmem:[%s681] sm:$0x10] %vm678, %v677
  %v683 = vld [vmem:[%s0] sm:$0xff]
  %684 = vrot.lane.b32.xlu0 %v683, 48
  %v685 = vpop.permute.xlu0 %684
  %vm686 = vcmask 130048
  %s687 = scalar_lea.vmem %s1, 5
  %688 = vst.msk [vmem:[%s687] ss:$8 sm:$0xf] %vm686, %v685
  %s689 = scalar_lea.vmem %s1, 5
  %690 = vst.msk [vmem:[%s689] ss:$8 sm:$0xf0] %vm686, %v685
  %s691 = scalar_lea.vmem %s0, 8
  %v692 = vld [vmem:[%s691] sm:$0xff]
  %693 = vrot.lane.b32.xlu0 %v692, 48
  %v694 = vpop.permute.xlu0 %693
  %vm695 = vcmask 130048
  %s696 = scalar_lea.vmem %s1, 69
  %697 = vst.msk [vmem:[%s696] ss:$8 sm:$0xf] %vm695, %v694
  %s698 = scalar_lea.vmem %s1, 69
  %699 = vst.msk [vmem:[%s698] ss:$8 sm:$0xf0] %vm695, %v694
  %s700 = scalar_lea.vmem %s0, 16
  %v701 = vld [vmem:[%s700] sm:$0xff]
  %702 = vrot.lane.b32.xlu0 %v701, 48
  %v703 = vpop.permute.xlu0 %702
  %vm704 = vcmask 130048
  %s705 = scalar_lea.vmem %s1, 133
  %706 = vst.msk [vmem:[%s705] ss:$8 sm:$0xf] %vm704, %v703
  %s707 = scalar_lea.vmem %s1, 133
  %708 = vst.msk [vmem:[%s707] ss:$8 sm:$0xf0] %vm704, %v703
  %s709 = scalar_lea.vmem %s0, 24
  %v710 = vld [vmem:[%s709] sm:$0xff]
  %711 = vrot.lane.b32.xlu0 %v710, 48
  %v712 = vpop.permute.xlu0 %711
  %vm713 = vcmask 130048
  %s714 = scalar_lea.vmem %s1, 197
  %715 = vst.msk [vmem:[%s714] ss:$8 sm:$0xf] %vm713, %v712
  %s716 = scalar_lea.vmem %s1, 197
  %717 = vst.msk [vmem:[%s716] ss:$8 sm:$0xf0] %vm713, %v712
  %s718 = scalar_lea.vmem %s0, 32
  %v719 = vld [vmem:[%s718] sm:$0xff]
  %720 = vrot.lane.b32.xlu0 %v719, 48
  %v721 = vpop.permute.xlu0 %720
  %vm722 = vcmask 130048
  %s723 = scalar_lea.vmem %s1, 261
  %724 = vst.msk [vmem:[%s723] ss:$8 sm:$0xf] %vm722, %v721
  %s725 = scalar_lea.vmem %s1, 261
  %726 = vst.msk [vmem:[%s725] ss:$8 sm:$0xf0] %vm722, %v721
  %s727 = scalar_lea.vmem %s0, 40
  %v728 = vld [vmem:[%s727] sm:$0xff]
  %729 = vrot.lane.b32.xlu0 %v728, 48
  %v730 = vpop.permute.xlu0 %729
  %vm731 = vcmask 130048
  %s732 = scalar_lea.vmem %s1, 325
  %733 = vst.msk [vmem:[%s732] ss:$8 sm:$0xf] %vm731, %v730
  %s734 = scalar_lea.vmem %s1, 325
  %735 = vst.msk [vmem:[%s734] ss:$8 sm:$0xf0] %vm731, %v730
  %s736 = scalar_lea.vmem %s0, 48
  %v737 = vld [vmem:[%s736] sm:$0xff]
  %738 = vrot.lane.b32.xlu0 %v737, 48
  %v739 = vpop.permute.xlu0 %738
  %vm740 = vcmask 130048
  %s741 = scalar_lea.vmem %s1, 389
  %742 = vst.msk [vmem:[%s741] ss:$8 sm:$0xf] %vm740, %v739
  %s743 = scalar_lea.vmem %s1, 389
  %744 = vst.msk [vmem:[%s743] ss:$8 sm:$0xf0] %vm740, %v739
  %s745 = scalar_lea.vmem %s0, 56
  %v746 = vld [vmem:[%s745] sm:$0xff]
  %747 = vrot.lane.b32.xlu0 %v746, 48
  %v748 = vpop.permute.xlu0 %747
  %vm749 = vcmask 130048
  %s750 = scalar_lea.vmem %s1, 453
  %751 = vst.msk [vmem:[%s750] ss:$8 sm:$0xf] %vm749, %v748
  %s752 = scalar_lea.vmem %s1, 453
  %753 = vst.msk [vmem:[%s752] ss:$8 sm:$0xf0] %vm749, %v748
  %s754 = scalar_lea.vmem %s0, 64
  %v755 = vld [vmem:[%s754] sm:$0xff]
  %756 = vrot.lane.b32.xlu0 %v755, 48
  %v757 = vpop.permute.xlu0 %756
  %vm758 = vcmask 130048
  %s759 = scalar_lea.vmem %s1, 517
  %760 = vst.msk [vmem:[%s759] ss:$8 sm:$0xf] %vm758, %v757
  %s761 = scalar_lea.vmem %s1, 517
  %762 = vst.msk [vmem:[%s761] ss:$8 sm:$0xf0] %vm758, %v757
  %s763 = scalar_lea.vmem %s0, 72
  %v764 = vld [vmem:[%s763] sm:$0xff]
  %765 = vrot.lane.b32.xlu0 %v764, 48
  %v766 = vpop.permute.xlu0 %765
  %vm767 = vcmask 130048
  %s768 = scalar_lea.vmem %s1, 581
  %769 = vst.msk [vmem:[%s768] ss:$8 sm:$0xf] %vm767, %v766
  %s770 = scalar_lea.vmem %s1, 581
  %771 = vst.msk [vmem:[%s770] ss:$8 sm:$0xf0] %vm767, %v766
  %s772 = scalar_lea.vmem %s0, 80
  %v773 = vld [vmem:[%s772] sm:$0xff]
  %774 = vrot.lane.b32.xlu0 %v773, 48
  %v775 = vpop.permute.xlu0 %774
  %vm776 = vcmask 130048
  %s777 = scalar_lea.vmem %s1, 645
  %778 = vst.msk [vmem:[%s777] ss:$8 sm:$0xf] %vm776, %v775
  %s779 = scalar_lea.vmem %s1, 645
  %780 = vst.msk [vmem:[%s779] ss:$8 sm:$0xf0] %vm776, %v775
  %s781 = scalar_lea.vmem %s0, 88
  %v782 = vld [vmem:[%s781] sm:$0xff]
  %783 = vrot.lane.b32.xlu0 %v782, 48
  %v784 = vpop.permute.xlu0 %783
  %vm785 = vcmask 130048
  %s786 = scalar_lea.vmem %s1, 709
  %787 = vst.msk [vmem:[%s786] ss:$8 sm:$0xf] %vm785, %v784
  %s788 = scalar_lea.vmem %s1, 709
  %789 = vst.msk [vmem:[%s788] ss:$8 sm:$0xf0] %vm785, %v784
  %s790 = scalar_lea.vmem %s0, 96
  %v791 = vld [vmem:[%s790] sm:$0xff]
  %792 = vrot.lane.b32.xlu0 %v791, 48
  %v793 = vpop.permute.xlu0 %792
  %vm794 = vcmask 130048
  %s795 = scalar_lea.vmem %s1, 773
  %796 = vst.msk [vmem:[%s795] ss:$8 sm:$0xf] %vm794, %v793
  %s797 = scalar_lea.vmem %s1, 773
  %798 = vst.msk [vmem:[%s797] ss:$8 sm:$0xf0] %vm794, %v793
  %s799 = scalar_lea.vmem %s0, 104
  %v800 = vld [vmem:[%s799] sm:$0xff]
  %801 = vrot.lane.b32.xlu0 %v800, 48
  %v802 = vpop.permute.xlu0 %801
  %vm803 = vcmask 130048
  %s804 = scalar_lea.vmem %s1, 837
  %805 = vst.msk [vmem:[%s804] ss:$8 sm:$0xf] %vm803, %v802
  %s806 = scalar_lea.vmem %s1, 837
  %807 = vst.msk [vmem:[%s806] ss:$8 sm:$0xf0] %vm803, %v802
  %s808 = scalar_lea.vmem %s0, 112
  %v809 = vld [vmem:[%s808] sm:$0xff]
  %810 = vrot.lane.b32.xlu0 %v809, 48
  %v811 = vpop.permute.xlu0 %810
  %vm812 = vcmask 130048
  %s813 = scalar_lea.vmem %s1, 901
  %814 = vst.msk [vmem:[%s813] ss:$8 sm:$0xf] %vm812, %v811
  %s815 = scalar_lea.vmem %s1, 901
  %816 = vst.msk [vmem:[%s815] ss:$8 sm:$0xf0] %vm812, %v811
  %s817 = scalar_lea.vmem %s0, 120
  %v818 = vld [vmem:[%s817] sm:$0x1f]
  %819 = vrot.lane.b32.xlu0 %v818, 48
  %v820 = vpop.permute.xlu0 %819
  %vm821 = vcmask 130048
  %s822 = scalar_lea.vmem %s1, 965
  %823 = vst.msk [vmem:[%s822] ss:$8 sm:$0xf] %vm821, %v820
  %s824 = scalar_lea.vmem %s1, 993
  %825 = vst.msk [vmem:[%s824] sm:$0x10] %vm821, %v820
  %v826 = vld [vmem:[%s0] sm:$0xff]
  %827 = vrot.lane.b32.xlu0 %v826, 32
  %v828 = vpop.permute.xlu0 %827
  %vm829 = vcmask 130048
  %s830 = scalar_lea.vmem %s1, 6
  %831 = vst.msk [vmem:[%s830] ss:$8 sm:$0xf] %vm829, %v828
  %s832 = scalar_lea.vmem %s1, 6
  %833 = vst.msk [vmem:[%s832] ss:$8 sm:$0xf0] %vm829, %v828
  %s834 = scalar_lea.vmem %s0, 8
  %v835 = vld [vmem:[%s834] sm:$0xff]
  %836 = vrot.lane.b32.xlu0 %v835, 32
  %v837 = vpop.permute.xlu0 %836
  %vm838 = vcmask 130048
  %s839 = scalar_lea.vmem %s1, 70
  %840 = vst.msk [vmem:[%s839] ss:$8 sm:$0xf] %vm838, %v837
  %s841 = scalar_lea.vmem %s1, 70
  %842 = vst.msk [vmem:[%s841] ss:$8 sm:$0xf0] %vm838, %v837
  %s843 = scalar_lea.vmem %s0, 16
  %v844 = vld [vmem:[%s843] sm:$0xff]
  %845 = vrot.lane.b32.xlu0 %v844, 32
  %v846 = vpop.permute.xlu0 %845
  %vm847 = vcmask 130048
  %s848 = scalar_lea.vmem %s1, 134
  %849 = vst.msk [vmem:[%s848] ss:$8 sm:$0xf] %vm847, %v846
  %s850 = scalar_lea.vmem %s1, 134
  %851 = vst.msk [vmem:[%s850] ss:$8 sm:$0xf0] %vm847, %v846
  %s852 = scalar_lea.vmem %s0, 24
  %v853 = vld [vmem:[%s852] sm:$0xff]
  %854 = vrot.lane.b32.xlu0 %v853, 32
  %v855 = vpop.permute.xlu0 %854
  %vm856 = vcmask 130048
  %s857 = scalar_lea.vmem %s1, 198
  %858 = vst.msk [vmem:[%s857] ss:$8 sm:$0xf] %vm856, %v855
  %s859 = scalar_lea.vmem %s1, 198
  %860 = vst.msk [vmem:[%s859] ss:$8 sm:$0xf0] %vm856, %v855
  %s861 = scalar_lea.vmem %s0, 32
  %v862 = vld [vmem:[%s861] sm:$0xff]
  %863 = vrot.lane.b32.xlu0 %v862, 32
  %v864 = vpop.permute.xlu0 %863
  %vm865 = vcmask 130048
  %s866 = scalar_lea.vmem %s1, 262
  %867 = vst.msk [vmem:[%s866] ss:$8 sm:$0xf] %vm865, %v864
  %s868 = scalar_lea.vmem %s1, 262
  %869 = vst.msk [vmem:[%s868] ss:$8 sm:$0xf0] %vm865, %v864
  %s870 = scalar_lea.vmem %s0, 40
  %v871 = vld [vmem:[%s870] sm:$0xff]
  %872 = vrot.lane.b32.xlu0 %v871, 32
  %v873 = vpop.permute.xlu0 %872
  %vm874 = vcmask 130048
  %s875 = scalar_lea.vmem %s1, 326
  %876 = vst.msk [vmem:[%s875] ss:$8 sm:$0xf] %vm874, %v873
  %s877 = scalar_lea.vmem %s1, 326
  %878 = vst.msk [vmem:[%s877] ss:$8 sm:$0xf0] %vm874, %v873
  %s879 = scalar_lea.vmem %s0, 48
  %v880 = vld [vmem:[%s879] sm:$0xff]
  %881 = vrot.lane.b32.xlu0 %v880, 32
  %v882 = vpop.permute.xlu0 %881
  %vm883 = vcmask 130048
  %s884 = scalar_lea.vmem %s1, 390
  %885 = vst.msk [vmem:[%s884] ss:$8 sm:$0xf] %vm883, %v882
  %s886 = scalar_lea.vmem %s1, 390
  %887 = vst.msk [vmem:[%s886] ss:$8 sm:$0xf0] %vm883, %v882
  %s888 = scalar_lea.vmem %s0, 56
  %v889 = vld [vmem:[%s888] sm:$0xff]
  %890 = vrot.lane.b32.xlu0 %v889, 32
  %v891 = vpop.permute.xlu0 %890
  %vm892 = vcmask 130048
  %s893 = scalar_lea.vmem %s1, 454
  %894 = vst.msk [vmem:[%s893] ss:$8 sm:$0xf] %vm892, %v891
  %s895 = scalar_lea.vmem %s1, 454
  %896 = vst.msk [vmem:[%s895] ss:$8 sm:$0xf0] %vm892, %v891
  %s897 = scalar_lea.vmem %s0, 64
  %v898 = vld [vmem:[%s897] sm:$0xff]
  %899 = vrot.lane.b32.xlu0 %v898, 32
  %v900 = vpop.permute.xlu0 %899
  %vm901 = vcmask 130048
  %s902 = scalar_lea.vmem %s1, 518
  %903 = vst.msk [vmem:[%s902] ss:$8 sm:$0xf] %vm901, %v900
  %s904 = scalar_lea.vmem %s1, 518
  %905 = vst.msk [vmem:[%s904] ss:$8 sm:$0xf0] %vm901, %v900
  %s906 = scalar_lea.vmem %s0, 72
  %v907 = vld [vmem:[%s906] sm:$0xff]
  %908 = vrot.lane.b32.xlu0 %v907, 32
  %v909 = vpop.permute.xlu0 %908
  %vm910 = vcmask 130048
  %s911 = scalar_lea.vmem %s1, 582
  %912 = vst.msk [vmem:[%s911] ss:$8 sm:$0xf] %vm910, %v909
  %s913 = scalar_lea.vmem %s1, 582
  %914 = vst.msk [vmem:[%s913] ss:$8 sm:$0xf0] %vm910, %v909
  %s915 = scalar_lea.vmem %s0, 80
  %v916 = vld [vmem:[%s915] sm:$0xff]
  %917 = vrot.lane.b32.xlu0 %v916, 32
  %v918 = vpop.permute.xlu0 %917
  %vm919 = vcmask 130048
  %s920 = scalar_lea.vmem %s1, 646
  %921 = vst.msk [vmem:[%s920] ss:$8 sm:$0xf] %vm919, %v918
  %s922 = scalar_lea.vmem %s1, 646
  %923 = vst.msk [vmem:[%s922] ss:$8 sm:$0xf0] %vm919, %v918
  %s924 = scalar_lea.vmem %s0, 88
  %v925 = vld [vmem:[%s924] sm:$0xff]
  %926 = vrot.lane.b32.xlu0 %v925, 32
  %v927 = vpop.permute.xlu0 %926
  %vm928 = vcmask 130048
  %s929 = scalar_lea.vmem %s1, 710
  %930 = vst.msk [vmem:[%s929] ss:$8 sm:$0xf] %vm928, %v927
  %s931 = scalar_lea.vmem %s1, 710
  %932 = vst.msk [vmem:[%s931] ss:$8 sm:$0xf0] %vm928, %v927
  %s933 = scalar_lea.vmem %s0, 96
  %v934 = vld [vmem:[%s933] sm:$0xff]
  %935 = vrot.lane.b32.xlu0 %v934, 32
  %v936 = vpop.permute.xlu0 %935
  %vm937 = vcmask 130048
  %s938 = scalar_lea.vmem %s1, 774
  %939 = vst.msk [vmem:[%s938] ss:$8 sm:$0xf] %vm937, %v936
  %s940 = scalar_lea.vmem %s1, 774
  %941 = vst.msk [vmem:[%s940] ss:$8 sm:$0xf0] %vm937, %v936
  %s942 = scalar_lea.vmem %s0, 104
  %v943 = vld [vmem:[%s942] sm:$0xff]
  %944 = vrot.lane.b32.xlu0 %v943, 32
  %v945 = vpop.permute.xlu0 %944
  %vm946 = vcmask 130048
  %s947 = scalar_lea.vmem %s1, 838
  %948 = vst.msk [vmem:[%s947] ss:$8 sm:$0xf] %vm946, %v945
  %s949 = scalar_lea.vmem %s1, 838
  %950 = vst.msk [vmem:[%s949] ss:$8 sm:$0xf0] %vm946, %v945
  %s951 = scalar_lea.vmem %s0, 112
  %v952 = vld [vmem:[%s951] sm:$0xff]
  %953 = vrot.lane.b32.xlu0 %v952, 32
  %v954 = vpop.permute.xlu0 %953
  %vm955 = vcmask 130048
  %s956 = scalar_lea.vmem %s1, 902
  %957 = vst.msk [vmem:[%s956] ss:$8 sm:$0xf] %vm955, %v954
  %s958 = scalar_lea.vmem %s1, 902
  %959 = vst.msk [vmem:[%s958] ss:$8 sm:$0xf0] %vm955, %v954
  %s960 = scalar_lea.vmem %s0, 120
  %v961 = vld [vmem:[%s960] sm:$0x1f]
  %962 = vrot.lane.b32.xlu0 %v961, 32
  %v963 = vpop.permute.xlu0 %962
  %vm964 = vcmask 130048
  %s965 = scalar_lea.vmem %s1, 966
  %966 = vst.msk [vmem:[%s965] ss:$8 sm:$0xf] %vm964, %v963
  %s967 = scalar_lea.vmem %s1, 994
  %968 = vst.msk [vmem:[%s967] sm:$0x10] %vm964, %v963
  %v969 = vld [vmem:[%s0] sm:$0xff]
  %970 = vrot.lane.b32.xlu0 %v969, 16
  %v971 = vpop.permute.xlu0 %970
  %vm972 = vcmask 130048
  %s973 = scalar_lea.vmem %s1, 7
  %974 = vst.msk [vmem:[%s973] ss:$8 sm:$0xf] %vm972, %v971
  %s975 = scalar_lea.vmem %s1, 7
  %976 = vst.msk [vmem:[%s975] ss:$8 sm:$0xf0] %vm972, %v971
  %s977 = scalar_lea.vmem %s0, 8
  %v978 = vld [vmem:[%s977] sm:$0xff]
  %979 = vrot.lane.b32.xlu0 %v978, 16
  %v980 = vpop.permute.xlu0 %979
  %vm981 = vcmask 130048
  %s982 = scalar_lea.vmem %s1, 71
  %983 = vst.msk [vmem:[%s982] ss:$8 sm:$0xf] %vm981, %v980
  %s984 = scalar_lea.vmem %s1, 71
  %985 = vst.msk [vmem:[%s984] ss:$8 sm:$0xf0] %vm981, %v980
  %s986 = scalar_lea.vmem %s0, 16
  %v987 = vld [vmem:[%s986] sm:$0xff]
  %988 = vrot.lane.b32.xlu0 %v987, 16
  %v989 = vpop.permute.xlu0 %988
  %vm990 = vcmask 130048
  %s991 = scalar_lea.vmem %s1, 135
  %992 = vst.msk [vmem:[%s991] ss:$8 sm:$0xf] %vm990, %v989
  %s993 = scalar_lea.vmem %s1, 135
  %994 = vst.msk [vmem:[%s993] ss:$8 sm:$0xf0] %vm990, %v989
  %s995 = scalar_lea.vmem %s0, 24
  %v996 = vld [vmem:[%s995] sm:$0xff]
  %997 = vrot.lane.b32.xlu0 %v996, 16
  %v998 = vpop.permute.xlu0 %997
  %vm999 = vcmask 130048
  %s1000 = scalar_lea.vmem %s1, 199
  %1001 = vst.msk [vmem:[%s1000] ss:$8 sm:$0xf] %vm999, %v998
  %s1002 = scalar_lea.vmem %s1, 199
  %1003 = vst.msk [vmem:[%s1002] ss:$8 sm:$0xf0] %vm999, %v998
  %s1004 = scalar_lea.vmem %s0, 32
  %v1005 = vld [vmem:[%s1004] sm:$0xff]
  %1006 = vrot.lane.b32.xlu0 %v1005, 16
  %v1007 = vpop.permute.xlu0 %1006
  %vm1008 = vcmask 130048
  %s1009 = scalar_lea.vmem %s1, 263
  %1010 = vst.msk [vmem:[%s1009] ss:$8 sm:$0xf] %vm1008, %v1007
  %s1011 = scalar_lea.vmem %s1, 263
  %1012 = vst.msk [vmem:[%s1011] ss:$8 sm:$0xf0] %vm1008, %v1007
  %s1013 = scalar_lea.vmem %s0, 40
  %v1014 = vld [vmem:[%s1013] sm:$0xff]
  %1015 = vrot.lane.b32.xlu0 %v1014, 16
  %v1016 = vpop.permute.xlu0 %1015
  %vm1017 = vcmask 130048
  %s1018 = scalar_lea.vmem %s1, 327
  %1019 = vst.msk [vmem:[%s1018] ss:$8 sm:$0xf] %vm1017, %v1016
  %s1020 = scalar_lea.vmem %s1, 327
  %1021 = vst.msk [vmem:[%s1020] ss:$8 sm:$0xf0] %vm1017, %v1016
  %s1022 = scalar_lea.vmem %s0, 48
  %v1023 = vld [vmem:[%s1022] sm:$0xff]
  %1024 = vrot.lane.b32.xlu0 %v1023, 16
  %v1025 = vpop.permute.xlu0 %1024
  %vm1026 = vcmask 130048
  %s1027 = scalar_lea.vmem %s1, 391
  %1028 = vst.msk [vmem:[%s1027] ss:$8 sm:$0xf] %vm1026, %v1025
  %s1029 = scalar_lea.vmem %s1, 391
  %1030 = vst.msk [vmem:[%s1029] ss:$8 sm:$0xf0] %vm1026, %v1025
  %s1031 = scalar_lea.vmem %s0, 56
  %v1032 = vld [vmem:[%s1031] sm:$0xff]
  %1033 = vrot.lane.b32.xlu0 %v1032, 16
  %v1034 = vpop.permute.xlu0 %1033
  %vm1035 = vcmask 130048
  %s1036 = scalar_lea.vmem %s1, 455
  %1037 = vst.msk [vmem:[%s1036] ss:$8 sm:$0xf] %vm1035, %v1034
  %s1038 = scalar_lea.vmem %s1, 455
  %1039 = vst.msk [vmem:[%s1038] ss:$8 sm:$0xf0] %vm1035, %v1034
  %s1040 = scalar_lea.vmem %s0, 64
  %v1041 = vld [vmem:[%s1040] sm:$0xff]
  %1042 = vrot.lane.b32.xlu0 %v1041, 16
  %v1043 = vpop.permute.xlu0 %1042
  %vm1044 = vcmask 130048
  %s1045 = scalar_lea.vmem %s1, 519
  %1046 = vst.msk [vmem:[%s1045] ss:$8 sm:$0xf] %vm1044, %v1043
  %s1047 = scalar_lea.vmem %s1, 519
  %1048 = vst.msk [vmem:[%s1047] ss:$8 sm:$0xf0] %vm1044, %v1043
  %s1049 = scalar_lea.vmem %s0, 72
  %v1050 = vld [vmem:[%s1049] sm:$0xff]
  %1051 = vrot.lane.b32.xlu0 %v1050, 16
  %v1052 = vpop.permute.xlu0 %1051
  %vm1053 = vcmask 130048
  %s1054 = scalar_lea.vmem %s1, 583
  %1055 = vst.msk [vmem:[%s1054] ss:$8 sm:$0xf] %vm1053, %v1052
  %s1056 = scalar_lea.vmem %s1, 583
  %1057 = vst.msk [vmem:[%s1056] ss:$8 sm:$0xf0] %vm1053, %v1052
  %s1058 = scalar_lea.vmem %s0, 80
  %v1059 = vld [vmem:[%s1058] sm:$0xff]
  %1060 = vrot.lane.b32.xlu0 %v1059, 16
  %v1061 = vpop.permute.xlu0 %1060
  %vm1062 = vcmask 130048
  %s1063 = scalar_lea.vmem %s1, 647
  %1064 = vst.msk [vmem:[%s1063] ss:$8 sm:$0xf] %vm1062, %v1061
  %s1065 = scalar_lea.vmem %s1, 647
  %1066 = vst.msk [vmem:[%s1065] ss:$8 sm:$0xf0] %vm1062, %v1061
  %s1067 = scalar_lea.vmem %s0, 88
  %v1068 = vld [vmem:[%s1067] sm:$0xff]
  %1069 = vrot.lane.b32.xlu0 %v1068, 16
  %v1070 = vpop.permute.xlu0 %1069
  %vm1071 = vcmask 130048
  %s1072 = scalar_lea.vmem %s1, 711
  %1073 = vst.msk [vmem:[%s1072] ss:$8 sm:$0xf] %vm1071, %v1070
  %s1074 = scalar_lea.vmem %s1, 711
  %1075 = vst.msk [vmem:[%s1074] ss:$8 sm:$0xf0] %vm1071, %v1070
  %s1076 = scalar_lea.vmem %s0, 96
  %v1077 = vld [vmem:[%s1076] sm:$0xff]
  %1078 = vrot.lane.b32.xlu0 %v1077, 16
  %v1079 = vpop.permute.xlu0 %1078
  %vm1080 = vcmask 130048
  %s1081 = scalar_lea.vmem %s1, 775
  %1082 = vst.msk [vmem:[%s1081] ss:$8 sm:$0xf] %vm1080, %v1079
  %s1083 = scalar_lea.vmem %s1, 775
  %1084 = vst.msk [vmem:[%s1083] ss:$8 sm:$0xf0] %vm1080, %v1079
  %s1085 = scalar_lea.vmem %s0, 104
  %v1086 = vld [vmem:[%s1085] sm:$0xff]
  %1087 = vrot.lane.b32.xlu0 %v1086, 16
  %v1088 = vpop.permute.xlu0 %1087
  %vm1089 = vcmask 130048
  %s1090 = scalar_lea.vmem %s1, 839
  %1091 = vst.msk [vmem:[%s1090] ss:$8 sm:$0xf] %vm1089, %v1088
  %s1092 = scalar_lea.vmem %s1, 839
  %1093 = vst.msk [vmem:[%s1092] ss:$8 sm:$0xf0] %vm1089, %v1088
  %s1094 = scalar_lea.vmem %s0, 112
  %v1095 = vld [vmem:[%s1094] sm:$0xff]
  %1096 = vrot.lane.b32.xlu0 %v1095, 16
  %v1097 = vpop.permute.xlu0 %1096
  %vm1098 = vcmask 130048
  %s1099 = scalar_lea.vmem %s1, 903
  %1100 = vst.msk [vmem:[%s1099] ss:$8 sm:$0xf] %vm1098, %v1097
  %s1101 = scalar_lea.vmem %s1, 903
  %1102 = vst.msk [vmem:[%s1101] ss:$8 sm:$0xf0] %vm1098, %v1097
  %s1103 = scalar_lea.vmem %s0, 120
  %v1104 = vld [vmem:[%s1103] sm:$0x1f]
  %1105 = vrot.lane.b32.xlu0 %v1104, 16
  %v1106 = vpop.permute.xlu0 %1105
  %vm1107 = vcmask 130048
  %s1108 = scalar_lea.vmem %s1, 967
  %1109 = vst.msk [vmem:[%s1108] ss:$8 sm:$0xf] %vm1107, %v1106
  %s1110 = scalar_lea.vmem %s1, 995
  %1111 = vst.msk [vmem:[%s1110] sm:$0x10] %vm1107, %v1106

// kernel: conv_dft_forward.1
$region0: #{conv_dft_forward.1}
  #allocation0 [shape = 'u32[]', space=smem, size = 0x4, offset = 0x4, fixed_abs, tag = 'smem constant byte address 0x4 - core index']
  #allocation1 [shape = 'u32[72,128]{1,0:T(1,128)}', space=vmem, size = 0x9000, scoped, tag = 'internal scratch']
  %s0 = inlined_call_operand.vmem [shape: f32[1001,16], index: 0, kind: input, shape index: {}]
  %s1 = inlined_call_operand.vmem [shape: f32[1000,16], index: 1, kind: input, shape index: {}]
  %s2 = inlined_call_operand.vmem [shape: f32[64,16], index: 2, kind: input, shape index: {}]
  %s3 = inlined_call_operand.vmem [shape: f32[64,16], index: 3, kind: input, shape index: {}]
  %s4 = inlined_call_operand.vmem [shape: f32[64,1], index: 4, kind: input, shape index: {}]
  %s5 = inlined_call_operand.vmem [shape: f32[32,32], index: 5, kind: input, shape index: {}]
  %s6 = inlined_call_operand.vmem [shape: f32[32,1], index: 6, kind: input, shape index: {}]
  %s7 = inlined_call_operand.vmem [shape: f32[2,17,1000], index: 7, kind: output, shape index: {0}]
  %s8 = inlined_call_operand.hbm [shape: f32[17,1000], index: 8, kind: output, shape index: {1}]
  %s9 = inlined_call_operand.vmem [shape: f32[32,1000], index: 9, kind: output, shape index: {2}]
  %10 = xla_tuple %s7, %s8, %s9
  %s11 = sld [smem:[#allocation0]]
  $region115: #{conv_dft_forward.1} parent=0
    _
  %s13 = ssub.s32 1, %s11
  %s14 = scalar_select 0, %s13, %s11
  $region1: #{conv_dft_forward.1} parent=0
    #allocation2 [shape = 'u8[196608]{0}', space=vmem, size = 0x30000, scoped, tag = 'output window, operand 0']
    #allocation3 [shape = 'u8[98304]{0}', space=vmem, size = 0x18000, scoped, tag = 'output window, operand 1']
    #allocation4 [shape = 's32[2]{0}', space=sflag, size = 0x8, scoped, tag = 'scoped memory for conv_dft_forward.1']
    #allocation5 [shape = 'u8[131072]{0}', space=vmem, size = 0x20000, scoped, tag = 'output window, operand 2']
    %15 = vsyncpa [#allocation4], 0
    %s16 = scalar_lea.sflag [#allocation4], 1
    %17 = vsyncpa %s16, 0
    loop: start=0, step=1, limit=4
    $region2: #{conv_dft_forward.1} parent=1 // loop_pre_header
      _
    $region3: #{conv_dft_forward.1} parent=1 // loop_header
      %s19 = sphi 0, %s23
      %p20 = scmp.ge.s32.totalorder %s19, 4
      %s29 = sphi 0, %s31
      %s32 = sphi 0, %s29
      %s33 = sphi 0, %s32
      %s49 = sphi 0, %s33
      %s55 = sphi 0, %s57
      %s58 = sphi 0, %s55
      %s59 = sphi 0, %s58
      %s75 = sphi 0, %s59
      %s79 = sphi 0, %s79
      %s81 = sphi 0, %s79
      %s82 = sphi 0, %s81
      %s96 = sphi 0, %s82
      %s100 = sphi 0, %s100
      %s102 = sphi 0, %s100
      %s103 = sphi 0, %s102
      %s117 = sphi 0, %s103
      %s121 = sphi 0, %s121
      %s123 = sphi 0, %s121
      %s124 = sphi 0, %s123
      %s138 = sphi 0, %s124
      %s142 = sphi 0, %s142
      %s144 = sphi 0, %s142
      %s145 = sphi 0, %s144
      %s159 = sphi 0, %s145
      %s163 = sphi 0, %s163
      %s165 = sphi 0, %s163
      %s166 = sphi 0, %s165
      %s180 = sphi 0, %s166
      %s186 = sphi 0, %s188
      %s189 = sphi 0, %s186
      %s190 = sphi 0, %s189
      %s206 = sphi 0, %s190
      %s212 = sphi 0, %s214
      %s215 = sphi 0, %s212
      %s216 = sphi 0, %s215
      %s232 = sphi 0, %s216
      %s238 = sphi 0, %s240
      %s241 = sphi 0, %s238
      %s242 = sphi 0, %s241
      %s258 = sphi 0, %s242
    $region4: #{conv_dft_forward.1} parent=1 // loop_header_branch
      %22 = sbr.rel (%p20) target = $region8
    $region5: #{conv_dft_forward.1} parent=1 // loop_body
      %s24 = ssub.s32 %s19, 1
      %s25 = ssub.s32 %s19, 2
      %s26 = sadd.s32 %s19, 1
      %s27 = ssub.s32 %s19, %s26
      %p28 = scmp.eq.s32.totalorder %s27, 0
      %s30 = sadd.s32 %s29, 1
      %s31 = scalar_select %p28, %s29, %s30
      %p34 = pneg %p28
      %p35 = scmp.eq.s32.totalorder %s19, 1
      %p36 = por %p34, %p35
      %p37 = scmp.ne.s32.totalorder %s29, %s32
      %p38 = scmp.eq.s32.totalorder %s19, 0
      %p39 = por %p37, %p38
      %p40 = scmp.ne.s32.totalorder %s29, %s32
      %p41 = scmp.eq.s32.totalorder %s24, 1
      %p42 = por %p40, %p41
      %p43 = scmp.ne.s32.totalorder %s32, %s33
      %p44 = scmp.eq.s32.totalorder %s24, 0
      %p45 = por %p43, %p44
      %p46 = scmp.ne.s32.totalorder %s32, %s33
      %p47 = scmp.eq.s32.totalorder %s25, 1
      %p48 = por %p46, %p47
      %p50 = scmp.ne.s32.totalorder %s33, %s49
      %p51 = scmp.eq.s32.totalorder %s25, 0
      %p52 = por %p50, %p51
      %s53 = ssub.s32 %s19, %s26
      %p54 = scmp.eq.s32.totalorder %s53, 0
      %s56 = sadd.s32 %s55, 1
      %s57 = scalar_select %p54, %s55, %s56
      %p60 = pneg %p54
      %p61 = scmp.eq.s32.totalorder %s19, 1
      %p62 = por %p60, %p61
      %p63 = scmp.ne.s32.totalorder %s55, %s58
      %p64 = scmp.eq.s32.totalorder %s19, 0
      %p65 = por %p63, %p64
      %p66 = scmp.ne.s32.totalorder %s55, %s58
      %p67 = scmp.eq.s32.totalorder %s24, 1
      %p68 = por %p66, %p67
      %p69 = scmp.ne.s32.totalorder %s58, %s59
      %p70 = scmp.eq.s32.totalorder %s24, 0
      %p71 = por %p69, %p70
      %p72 = scmp.ne.s32.totalorder %s58, %s59
      %p73 = scmp.eq.s32.totalorder %s25, 1
      %p74 = por %p72, %p73
      %p76 = scmp.ne.s32.totalorder %s59, %s75
      %p77 = scmp.eq.s32.totalorder %s25, 0
      %p78 = por %p76, %p77
      %s80 = sadd.s32 %s79, 1
      %p83 = scmp.eq.s32.totalorder %s19, 1
      %p84 = scmp.ne.s32.totalorder %s79, %s81
      %p85 = scmp.eq.s32.totalorder %s19, 0
      %p86 = por %p84, %p85
      %p87 = scmp.ne.s32.totalorder %s79, %s81
      %p88 = scmp.eq.s32.totalorder %s24, 1
      %p89 = por %p87, %p88
      %p90 = scmp.ne.s32.totalorder %s81, %s82
      %p91 = scmp.eq.s32.totalorder %s24, 0
      %p92 = por %p90, %p91
      %p93 = scmp.ne.s32.totalorder %s81, %s82
      %p94 = scmp.eq.s32.totalorder %s25, 1
      %p95 = por %p93, %p94
      %p97 = scmp.ne.s32.totalorder %s82, %s96
      %p98 = scmp.eq.s32.totalorder %s25, 0
      %p99 = por %p97, %p98
      %s101 = sadd.s32 %s100, 1
      %p104 = scmp.eq.s32.totalorder %s19, 1
      %p105 = scmp.ne.s32.totalorder %s100, %s102
      %p106 = scmp.eq.s32.totalorder %s19, 0
      %p107 = por %p105, %p106
      %p108 = scmp.ne.s32.totalorder %s100, %s102
      %p109 = scmp.eq.s32.totalorder %s24, 1
      %p110 = por %p108, %p109
      %p111 = scmp.ne.s32.totalorder %s102, %s103
      %p112 = scmp.eq.s32.totalorder %s24, 0
      %p113 = por %p111, %p112
      %p114 = scmp.ne.s32.totalorder %s102, %s103
      %p115 = scmp.eq.s32.totalorder %s25, 1
      %p116 = por %p114, %p115
      %p118 = scmp.ne.s32.totalorder %s103, %s117
      %p119 = scmp.eq.s32.totalorder %s25, 0
      %p120 = por %p118, %p119
      %s122 = sadd.s32 %s121, 1
      %p125 = scmp.eq.s32.totalorder %s19, 1
      %p126 = scmp.ne.s32.totalorder %s121, %s123
      %p127 = scmp.eq.s32.totalorder %s19, 0
      %p128 = por %p126, %p127
      %p129 = scmp.ne.s32.totalorder %s121, %s123
      %p130 = scmp.eq.s32.totalorder %s24, 1
      %p131 = por %p129, %p130
      %p132 = scmp.ne.s32.totalorder %s123, %s124
      %p133 = scmp.eq.s32.totalorder %s24, 0
      %p134 = por %p132, %p133
      %p135 = scmp.ne.s32.totalorder %s123, %s124
      %p136 = scmp.eq.s32.totalorder %s25, 1
      %p137 = por %p135, %p136
      %p139 = scmp.ne.s32.totalorder %s124, %s138
      %p140 = scmp.eq.s32.totalorder %s25, 0
      %p141 = por %p139, %p140
      %s143 = sadd.s32 %s142, 1
      %p146 = scmp.eq.s32.totalorder %s19, 1
      %p147 = scmp.ne.s32.totalorder %s142, %s144
      %p148 = scmp.eq.s32.totalorder %s19, 0
      %p149 = por %p147, %p148
      %p150 = scmp.ne.s32.totalorder %s142, %s144
      %p151 = scmp.eq.s32.totalorder %s24, 1
      %p152 = por %p150, %p151
      %p153 = scmp.ne.s32.totalorder %s144, %s145
      %p154 = scmp.eq.s32.totalorder %s24, 0
      %p155 = por %p153, %p154
      %p156 = scmp.ne.s32.totalorder %s144, %s145
      %p157 = scmp.eq.s32.totalorder %s25, 1
      %p158 = por %p156, %p157
      %p160 = scmp.ne.s32.totalorder %s145, %s159
      %p161 = scmp.eq.s32.totalorder %s25, 0
      %p162 = por %p160, %p161
      %s164 = sadd.s32 %s163, 1
      %p167 = scmp.eq.s32.totalorder %s19, 1
      %p168 = scmp.ne.s32.totalorder %s163, %s165
      %p169 = scmp.eq.s32.totalorder %s19, 0
      %p170 = por %p168, %p169
      %p171 = scmp.ne.s32.totalorder %s163, %s165
      %p172 = scmp.eq.s32.totalorder %s24, 1
      %p173 = por %p171, %p172
      %p174 = scmp.ne.s32.totalorder %s165, %s166
      %p175 = scmp.eq.s32.totalorder %s24, 0
      %p176 = por %p174, %p175
      %p177 = scmp.ne.s32.totalorder %s165, %s166
      %p178 = scmp.eq.s32.totalorder %s25, 1
      %p179 = por %p177, %p178
      %p181 = scmp.ne.s32.totalorder %s166, %s180
      %p182 = scmp.eq.s32.totalorder %s25, 0
      %p183 = por %p181, %p182
      %s184 = ssub.s32 %s19, %s26
      %p185 = scmp.eq.s32.totalorder %s184, 0
      %s187 = sadd.s32 %s186, 1
      %s188 = scalar_select %p185, %s186, %s187
      %p191 = pneg %p185
      %p192 = scmp.eq.s32.totalorder %s19, 1
      %p193 = por %p191, %p192
      %p194 = scmp.ne.s32.totalorder %s186, %s189
      %p195 = scmp.eq.s32.totalorder %s19, 0
      %p196 = por %p194, %p195
      %p197 = scmp.ne.s32.totalorder %s186, %s189
      %p198 = scmp.eq.s32.totalorder %s24, 1
      %p199 = por %p197, %p198
      %p200 = scmp.ne.s32.totalorder %s189, %s190
      %p201 = scmp.eq.s32.totalorder %s24, 0
      %p202 = por %p200, %p201
      %p203 = scmp.ne.s32.totalorder %s189, %s190
      %p204 = scmp.eq.s32.totalorder %s25, 1
      %p205 = por %p203, %p204
      %p207 = scmp.ne.s32.totalorder %s190, %s206
      %p208 = scmp.eq.s32.totalorder %s25, 0
      %p209 = por %p207, %p208
      %s210 = ssub.s32 %s19, %s26
      %p211 = scmp.eq.s32.totalorder %s210, 0
      %s213 = sadd.s32 %s212, 1
      %s214 = scalar_select %p211, %s212, %s213
      %p217 = pneg %p211
      %p218 = scmp.eq.s32.totalorder %s19, 1
      %p219 = por %p217, %p218
      %p220 = scmp.ne.s32.totalorder %s212, %s215
      %p221 = scmp.eq.s32.totalorder %s19, 0
      %p222 = por %p220, %p221
      %p223 = scmp.ne.s32.totalorder %s212, %s215
      %p224 = scmp.eq.s32.totalorder %s24, 1
      %p225 = por %p223, %p224
      %p226 = scmp.ne.s32.totalorder %s215, %s216
      %p227 = scmp.eq.s32.totalorder %s24, 0
      %p228 = por %p226, %p227
      %p229 = scmp.ne.s32.totalorder %s215, %s216
      %p230 = scmp.eq.s32.totalorder %s25, 1
      %p231 = por %p229, %p230
      %p233 = scmp.ne.s32.totalorder %s216, %s232
      %p234 = scmp.eq.s32.totalorder %s25, 0
      %p235 = por %p233, %p234
      %s236 = ssub.s32 %s19, %s26
      %p237 = scmp.eq.s32.totalorder %s236, 0
      %s239 = sadd.s32 %s238, 1
      %s240 = scalar_select %p237, %s238, %s239
      %p243 = pneg %p237
      %p244 = scmp.eq.s32.totalorder %s19, 1
      %p245 = por %p243, %p244
      %p246 = scmp.ne.s32.totalorder %s238, %s241
      %p247 = scmp.eq.s32.totalorder %s19, 0
      %p248 = por %p246, %p247
      %p249 = scmp.ne.s32.totalorder %s238, %s241
      %p250 = scmp.eq.s32.totalorder %s24, 1
      %p251 = por %p249, %p250
      %p252 = scmp.ne.s32.totalorder %s241, %s242
      %p253 = scmp.eq.s32.totalorder %s24, 0
      %p254 = por %p252, %p253
      %p255 = scmp.ne.s32.totalorder %s241, %s242
      %p256 = scmp.eq.s32.totalorder %s25, 1
      %p257 = por %p255, %p256
      %p259 = scmp.ne.s32.totalorder %s242, %s258
      %p260 = scmp.eq.s32.totalorder %s25, 0
      %p261 = por %p259, %p260
      %p262 = scmp.le.s32.totalorder 1, %s19
      %p263 = scmp.lt.s32.totalorder %s19, 3
      %p264 = pnand %p262, %p263
      %p265 = pneg %p264
      // Predicated region
      $region9: #{conv_dft_forward.1} parent=5 // pred_check
        _
      $region10: #{conv_dft_forward.1} parent=5 // pred_check_branch
        %267 = sbr.rel (%p264) target = $region12
      $region11: #{conv_dft_forward.1} parent=5 // pred_region
        %s268 = ssub.s32 %s19, 1
        // Predicated region
        $region13: #{conv_dft_forward.1} parent=11 // pred_check
          %p269 = pneg %p92
        $region14: #{conv_dft_forward.1} parent=11 // pred_check_branch
          %271 = sbr.rel (%p269) target = $region16
        $region15: #{conv_dft_forward.1} parent=11 // pred_region
          _
        $region16: #{conv_dft_forward.1} parent=11 // pred_fallthru
          _
        // Predicated region
        $region17: #{conv_dft_forward.1} parent=11 // pred_check
          %p272 = pneg %p113
        $region18: #{conv_dft_forward.1} parent=11 // pred_check_branch
          %274 = sbr.rel (%p272) target = $region20
        $region19: #{conv_dft_forward.1} parent=11 // pred_region
          _
        $region20: #{conv_dft_forward.1} parent=11 // pred_fallthru
          _
        // Predicated region
        $region21: #{conv_dft_forward.1} parent=11 // pred_check
          %p275 = pneg %p134
        $region22: #{conv_dft_forward.1} parent=11 // pred_check_branch
          %277 = sbr.rel (%p275) target = $region24
        $region23: #{conv_dft_forward.1} parent=11 // pred_region
          _
        $region24: #{conv_dft_forward.1} parent=11 // pred_fallthru
          _
        // Predicated region
        $region25: #{conv_dft_forward.1} parent=11 // pred_check
          %p278 = pneg %p155
        $region26: #{conv_dft_forward.1} parent=11 // pred_check_branch
          %280 = sbr.rel (%p278) target = $region28
        $region27: #{conv_dft_forward.1} parent=11 // pred_region
          _
        $region28: #{conv_dft_forward.1} parent=11 // pred_fallthru
          _
        // Predicated region
        $region29: #{conv_dft_forward.1} parent=11 // pred_check
          %p281 = pneg %p176
        $region30: #{conv_dft_forward.1} parent=11 // pred_check_branch
          %283 = sbr.rel (%p281) target = $region32
        $region31: #{conv_dft_forward.1} parent=11 // pred_region
          _
        $region32: #{conv_dft_forward.1} parent=11 // pred_fallthru
          _
      $region12: #{conv_dft_forward.1} parent=5 // pred_fallthru
        _
      %p284 = scmp.lt.s32.totalorder %s19, 2
      // Predicated region
      $region33: #{conv_dft_forward.1} parent=5 // pred_check
        %p285 = pneg %p284
      $region34: #{conv_dft_forward.1} parent=5 // pred_check_branch
        %287 = sbr.rel (%p285) target = $region36
      $region35: #{conv_dft_forward.1} parent=5 // pred_region
        // Predicated region
        $region37: #{conv_dft_forward.1} parent=35 // pred_check
          %p288 = pneg %p39
        $region38: #{conv_dft_forward.1} parent=35 // pred_check_branch
          %290 = sbr.rel (%p288) target = $region40
        $region39: #{conv_dft_forward.1} parent=35 // pred_region
          %s291 = smul.u32 64, %s19
          %s292 = ssub.s32 126, %s291
          %p293 = scmp.lt.s32.totalorder %s292, 64
          %s294 = scalar_select %p293, %s292, 64
          %s295 = smul.u32 8, %s294
          %p296 = scmp.lt.s32.totalorder %s291, 125
          %s297 = scalar_select %p296, %s291, 125
          %s298 = smul.addr %s297, 8
          %s299 = scalar_lea.vmem %s0, %s298
          %s300 = smul.u32 64, %s19
          %s301 = ssub.s32 126, %s300
          %p302 = scmp.lt.s32.totalorder %s301, 64
          %s303 = scalar_select %p302, %s301, 64
          %s304 = smul.u32 8, %s303
        $region40: #{conv_dft_forward.1} parent=35 // pred_fallthru
          _
        // Predicated region
        $region41: #{conv_dft_forward.1} parent=35 // pred_check
          %p305 = pneg %p65
        $region42: #{conv_dft_forward.1} parent=35 // pred_check_branch
          %307 = sbr.rel (%p305) target = $region44
        $region43: #{conv_dft_forward.1} parent=35 // pred_region
          %s308 = smul.u32 64, %s19
          %s309 = ssub.s32 125, %s308
          %p310 = scmp.lt.s32.totalorder %s309, 64
          %s311 = scalar_select %p310, %s309, 64
          %s312 = smul.u32 8, %s311
          %p313 = scmp.lt.s32.totalorder %s308, 124
          %s314 = scalar_select %p313, %s308, 124
          %s315 = smul.addr %s314, 8
          %s316 = scalar_lea.vmem %s1, %s315
          %s317 = smul.u32 64, %s19
          %s318 = ssub.s32 125, %s317
          %p319 = scmp.lt.s32.totalorder %s318, 64
          %s320 = scalar_select %p319, %s318, 64
          %s321 = smul.u32 8, %s320
        $region44: #{conv_dft_forward.1} parent=35 // pred_fallthru
          _
      $region36: #{conv_dft_forward.1} parent=5 // pred_fallthru
        _
      %p322 = scmp.le.s32.totalorder 1, %s19
      %p323 = scmp.lt.s32.totalorder %s19, 3
      %p324 = pnand %p322, %p323
      %p325 = pneg %p324
      // Predicated region
      $region45: #{conv_dft_forward.1} parent=5 // pred_check
        _
      $region46: #{conv_dft_forward.1} parent=5 // pred_check_branch
        %327 = sbr.rel (%p324) target = $region48
      $region47: #{conv_dft_forward.1} parent=5 // pred_region
        %s328 = ssub.s32 %s19, 1
        %s329 = smul.u32 64, %s24
        %s330 = ssub.s32 126, %s329
        %p331 = scmp.lt.s32.totalorder %s330, 64
        %s332 = scalar_select %p331, %s330, 64
        %s333 = smul.u32 8, %s332
        %p334 = scmp.lt.s32.totalorder %s329, 125
        %s335 = scalar_select %p334, %s329, 125
        %s336 = smul.addr %s335, 8
        %s337 = scalar_lea.vmem %s0, %s336
        %p338 = pneg %p45
        %p339 = pneg %p42
        %s340 = smul.u32 64, %s24
        %s341 = ssub.s32 125, %s340
        %p342 = scmp.lt.s32.totalorder %s341, 64
        %s343 = scalar_select %p342, %s341, 64
        %s344 = smul.u32 8, %s343
        %p345 = scmp.lt.s32.totalorder %s340, 124
        %s346 = scalar_select %p345, %s340, 124
        %s347 = smul.addr %s346, 8
        %s348 = scalar_lea.vmem %s1, %s347
        %p349 = pneg %p71
        %p350 = pneg %p68
        %p351 = pneg %p92
        %p352 = pneg %p89
        %p353 = pneg %p113
        %p354 = pneg %p110
        %p355 = pneg %p134
        %p356 = pneg %p131
        %p357 = pneg %p155
        %p358 = pneg %p152
        %p359 = pneg %p176
        %p360 = pneg %p173
        %p361 = pneg %p202
        %p362 = pneg %p199
        %s363 = sand.u32 %s189, 1
        %s364 = sand.u32 %s189, 1
        %s365 = smul.addr %s364, 192
        %s366 = scalar_lea.vmem [#allocation2], %s365
        %p367 = pneg %p228
        %p368 = pneg %p225
        %s369 = sand.u32 %s215, 1
        %s370 = scalar_lea.sflag [#allocation4], %s369
        %s371 = sand.u32 %s215, 1
        %s372 = smul.addr %s371, 96
        %s373 = scalar_lea.vmem [#allocation3], %s372
        %p374 = pneg %p254
        %p375 = pneg %p251
        %s376 = sand.u32 %s241, 1
        %s377 = sand.u32 %s241, 1
        %s378 = smul.addr %s377, 128
        %s379 = scalar_lea.vmem [#allocation5], %s378
        %s380 = smul.u32 64, %s24
        %s381 = ssub.s32 126, %s380
        %p382 = scmp.lt.s32.totalorder %s381, 64
        %s383 = scalar_select %p382, %s381, 64
        %s384 = smul.u32 8, %s383
        %p385 = scmp.lt.s32.totalorder %s380, 125
        %s386 = scalar_select %p385, %s380, 125
        %s387 = smul.addr %s386, 8
        %s388 = scalar_lea.vmem %s0, %s387
        %s389 = smul.u32 64, %s24
        %s390 = ssub.s32 126, %s389
        %p391 = scmp.lt.s32.totalorder %s390, 64
        %s392 = scalar_select %p391, %s390, 64
        %s393 = smul.u32 8, %s392
        %s394 = smul.u32 64, %s24
        %s395 = ssub.s32 125, %s394
        %p396 = scmp.lt.s32.totalorder %s395, 64
        %s397 = scalar_select %p396, %s395, 64
        %s398 = smul.u32 8, %s397
        %p399 = scmp.lt.s32.totalorder %s394, 124
        %s400 = scalar_select %p399, %s394, 124
        %s401 = smul.addr %s400, 8
        %s402 = scalar_lea.vmem %s1, %s401
        %s403 = smul.u32 64, %s24
        %s404 = ssub.s32 125, %s403
        %p405 = scmp.lt.s32.totalorder %s404, 64
        %s406 = scalar_select %p405, %s404, 64
        %s407 = smul.u32 8, %s406
        %s408 = smul.u32 4, %s24
        %s409 = smul.u32 4, %s24
        %s410 = smul.u32 4, %s24
        %v411 = vld [vmem:[%s388] sm:$0xff]
        %v412 = vld [vmem:[%s388 + $0x8] sm:$0xff]
        %v413 = vld [vmem:[%s388 + $0x10] sm:$0xff]
        %v414 = vld [vmem:[%s388 + $0x18] sm:$0xff]
        %v415 = vld [vmem:[%s388 + $0x20] sm:$0xff]
        %v416 = vld [vmem:[%s388 + $0x28] sm:$0xff]
        %v417 = vld [vmem:[%s388 + $0x30] sm:$0xff]
        %v418 = vld [vmem:[%s388 + $0x38] sm:$0xff]
        %v419 = vld [vmem:[%s388 + $0x40] sm:$0xff]
        %v420 = vld [vmem:[%s388 + $0x48] sm:$0xff]
        %v421 = vld [vmem:[%s388 + $0x50] sm:$0xff]
        %v422 = vld [vmem:[%s388 + $0x58] sm:$0xff]
        %v423 = vld [vmem:[%s388 + $0x60] sm:$0xff]
        %v424 = vld [vmem:[%s388 + $0x68] sm:$0xff]
        %v425 = vld [vmem:[%s388 + $0x70] sm:$0xff]
        %v426 = vld [vmem:[%s388 + $0x78] sm:$0xff]
        %v427 = vld [vmem:[%s388 + $0x80] sm:$0xff]
        %v428 = vld [vmem:[%s388 + $0x88] sm:$0xff]
        %v429 = vld [vmem:[%s388 + $0x90] sm:$0xff]
        %v430 = vld [vmem:[%s388 + $0x98] sm:$0xff]
        %v431 = vld [vmem:[%s388 + $0xa0] sm:$0xff]
        %v432 = vld [vmem:[%s388 + $0xa8] sm:$0xff]
        %v433 = vld [vmem:[%s388 + $0xb0] sm:$0xff]
        %v434 = vld [vmem:[%s388 + $0xb8] sm:$0xff]
        %v435 = vld [vmem:[%s388 + $0xc0] sm:$0xff]
        %v436 = vld [vmem:[%s388 + $0xc8] sm:$0xff]
        %v437 = vld [vmem:[%s388 + $0xd0] sm:$0xff]
        %v438 = vld [vmem:[%s388 + $0xd8] sm:$0xff]
        %v439 = vld [vmem:[%s388 + $0xe0] sm:$0xff]
        %v440 = vld [vmem:[%s388 + $0xe8] sm:$0xff]
        %v441 = vld [vmem:[%s388 + $0xf0] sm:$0xff]
        %v442 = vld [vmem:[%s388 + $0xf8] sm:$0xff]
        %v443 = vld [vmem:[%s388 + $0x100] sm:$0xff]
        %v444 = vld [vmem:[%s388 + $0x108] sm:$0xff]
        %v445 = vld [vmem:[%s388 + $0x110] sm:$0xff]
        %v446 = vld [vmem:[%s388 + $0x118] sm:$0xff]
        %v447 = vld [vmem:[%s388 + $0x120] sm:$0xff]
        %v448 = vld [vmem:[%s388 + $0x128] sm:$0xff]
        %v449 = vld [vmem:[%s388 + $0x130] sm:$0xff]
        %v450 = vld [vmem:[%s388 + $0x138] sm:$0xff]
        %v451 = vld [vmem:[%s388 + $0x140] sm:$0xff]
        %v452 = vld [vmem:[%s388 + $0x148] sm:$0xff]
        %v453 = vld [vmem:[%s388 + $0x150] sm:$0xff]
        %v454 = vld [vmem:[%s388 + $0x158] sm:$0xff]
        %v455 = vld [vmem:[%s388 + $0x160] sm:$0xff]
        %v456 = vld [vmem:[%s388 + $0x168] sm:$0xff]
        %v457 = vld [vmem:[%s388 + $0x170] sm:$0xff]
        %v458 = vld [vmem:[%s388 + $0x178] sm:$0xff]
        %v459 = vld [vmem:[%s388 + $0x180] sm:$0xff]
        %v460 = vld [vmem:[%s388 + $0x188] sm:$0xff]
        %v461 = vld [vmem:[%s388 + $0x190] sm:$0xff]
        %v462 = vld [vmem:[%s388 + $0x198] sm:$0xff]
        %v463 = vld [vmem:[%s388 + $0x1a0] sm:$0xff]
        %v464 = vld [vmem:[%s388 + $0x1a8] sm:$0xff]
        %v465 = vld [vmem:[%s388 + $0x1b0] sm:$0xff]
        %v466 = vld [vmem:[%s388 + $0x1b8] sm:$0xff]
        %v467 = vld [vmem:[%s388 + $0x1c0] sm:$0xff]
        %v468 = vld [vmem:[%s388 + $0x1c8] sm:$0xff]
        %v469 = vld [vmem:[%s388 + $0x1d0] sm:$0xff]
        %v470 = vld [vmem:[%s388 + $0x1d8] sm:$0xff]
        %v471 = vld [vmem:[%s388 + $0x1e0] sm:$0xff]
        %v472 = vld [vmem:[%s388 + $0x1e8] sm:$0xff]
        %v473 = vld [vmem:[%s388 + $0x1f0] sm:$0xff]
        %v474 = vld [vmem:[%s388 + $0x1f8] sm:$0xff]
        %v475 = vld [vmem:[%s402] sm:$0xff]
        %v476 = vld [vmem:[%s402 + $0x8] sm:$0xff]
        %v477 = vld [vmem:[%s402 + $0x10] sm:$0xff]
        %v478 = vld [vmem:[%s402 + $0x18] sm:$0xff]
        %v479 = vld [vmem:[%s402 + $0x20] sm:$0xff]
        %v480 = vld [vmem:[%s402 + $0x28] sm:$0xff]
        %v481 = vld [vmem:[%s402 + $0x30] sm:$0xff]
        %v482 = vld [vmem:[%s402 + $0x38] sm:$0xff]
        %v483 = vld [vmem:[%s402 + $0x40] sm:$0xff]
        %v484 = vld [vmem:[%s402 + $0x48] sm:$0xff]
        %v485 = vld [vmem:[%s402 + $0x50] sm:$0xff]
        %v486 = vld [vmem:[%s402 + $0x58] sm:$0xff]
        %v487 = vld [vmem:[%s402 + $0x60] sm:$0xff]
        %v488 = vld [vmem:[%s402 + $0x68] sm:$0xff]
        %v489 = vld [vmem:[%s402 + $0x70] sm:$0xff]
        %v490 = vld [vmem:[%s402 + $0x78] sm:$0xff]
        %v491 = vld [vmem:[%s402 + $0x80] sm:$0xff]
        %v492 = vld [vmem:[%s402 + $0x88] sm:$0xff]
        %v493 = vld [vmem:[%s402 + $0x90] sm:$0xff]
        %v494 = vld [vmem:[%s402 + $0x98] sm:$0xff]
        %v495 = vld [vmem:[%s402 + $0xa0] sm:$0xff]
        %v496 = vld [vmem:[%s402 + $0xa8] sm:$0xff]
        %v497 = vld [vmem:[%s402 + $0xb0] sm:$0xff]
        %v498 = vld [vmem:[%s402 + $0xb8] sm:$0xff]
        %v499 = vld [vmem:[%s402 + $0xc0] sm:$0xff]
        %v500 = vld [vmem:[%s402 + $0xc8] sm:$0xff]
        %v501 = vld [vmem:[%s402 + $0xd0] sm:$0xff]
        %v502 = vld [vmem:[%s402 + $0xd8] sm:$0xff]
        %v503 = vld [vmem:[%s402 + $0xe0] sm:$0xff]
        %v504 = vld [vmem:[%s402 + $0xe8] sm:$0xff]
        %v505 = vld [vmem:[%s402 + $0xf0] sm:$0xff]
        %v506 = vld [vmem:[%s402 + $0xf8] sm:$0xff]
        %v507 = vld [vmem:[%s402 + $0x100] sm:$0xff]
        %v508 = vld [vmem:[%s402 + $0x108] sm:$0xff]
        %v509 = vld [vmem:[%s402 + $0x110] sm:$0xff]
        %v510 = vld [vmem:[%s402 + $0x118] sm:$0xff]
        %v511 = vld [vmem:[%s402 + $0x120] sm:$0xff]
        %v512 = vld [vmem:[%s402 + $0x128] sm:$0xff]
        %v513 = vld [vmem:[%s402 + $0x130] sm:$0xff]
        %v514 = vld [vmem:[%s402 + $0x138] sm:$0xff]
        %v515 = vld [vmem:[%s402 + $0x140] sm:$0xff]
        %v516 = vld [vmem:[%s402 + $0x148] sm:$0xff]
        %v517 = vld [vmem:[%s402 + $0x150] sm:$0xff]
        %v518 = vld [vmem:[%s402 + $0x158] sm:$0xff]
        %v519 = vld [vmem:[%s402 + $0x160] sm:$0xff]
        %v520 = vld [vmem:[%s402 + $0x168] sm:$0xff]
        %v521 = vld [vmem:[%s402 + $0x170] sm:$0xff]
        %v522 = vld [vmem:[%s402 + $0x178] sm:$0xff]
        %v523 = vld [vmem:[%s402 + $0x180] sm:$0xff]
        %v524 = vld [vmem:[%s402 + $0x188] sm:$0xff]
        %v525 = vld [vmem:[%s402 + $0x190] sm:$0xff]
        %v526 = vld [vmem:[%s402 + $0x198] sm:$0xff]
        %v527 = vld [vmem:[%s402 + $0x1a0] sm:$0xff]
        %v528 = vld [vmem:[%s402 + $0x1a8] sm:$0xff]
        %v529 = vld [vmem:[%s402 + $0x1b0] sm:$0xff]
        %v530 = vld [vmem:[%s402 + $0x1b8] sm:$0xff]
        %v531 = vld [vmem:[%s402 + $0x1c0] sm:$0xff]
        %v532 = vld [vmem:[%s402 + $0x1c8] sm:$0xff]
        %v533 = vld [vmem:[%s402 + $0x1d0] sm:$0xff]
        %v534 = vld [vmem:[%s402 + $0x1d8] sm:$0xff]
        %v535 = vld [vmem:[%s402 + $0x1e0] sm:$0xff]
        %v536 = vld [vmem:[%s402 + $0x1e8] sm:$0xff]
        %v537 = vld [vmem:[%s402 + $0x1f0] sm:$0xff]
        %v538 = vld [vmem:[%s402 + $0x1f8] sm:$0xff]
        %v539 = vld [vmem:[%s2] sm:$0xff]
        %v540 = vld [vmem:[%s2 + $0x8] sm:$0xff]
        %v541 = vld [vmem:[%s2 + $0x10] sm:$0xff]
        %v542 = vld [vmem:[%s2 + $0x18] sm:$0xff]
        %v543 = vld [vmem:[%s2 + $0x20] sm:$0xff]
        %v544 = vld [vmem:[%s2 + $0x28] sm:$0xff]
        %v545 = vld [vmem:[%s2 + $0x30] sm:$0xff]
        %v546 = vld [vmem:[%s2 + $0x38] sm:$0xff]
        %v547 = vld [vmem:[%s3] sm:$0xff]
        %v548 = vld [vmem:[%s3 + $0x8] sm:$0xff]
        %v549 = vld [vmem:[%s3 + $0x10] sm:$0xff]
        %v550 = vld [vmem:[%s3 + $0x18] sm:$0xff]
        %v551 = vld [vmem:[%s3 + $0x20] sm:$0xff]
        %v552 = vld [vmem:[%s3 + $0x28] sm:$0xff]
        %v553 = vld [vmem:[%s3 + $0x30] sm:$0xff]
        %v554 = vld [vmem:[%s3 + $0x38] sm:$0xff]
        %vm555 = vcmask 130048
        %v557 = vsel %vm555, %v547, 0
        %v560 = vsel %vm555, %v548, 0
        %v563 = vsel %vm555, %v549, 0
        %v566 = vsel %vm555, %v550, 0
        %v569 = vsel %vm555, %v551, 0
        %v572 = vsel %vm555, %v552, 0
        %v575 = vsel %vm555, %v553, 0
        %v578 = vsel %vm555, %v554, 0
        %v581 = vsel %vm555, %v475, 0
        %v584 = vsel %vm555, %v476, 0
        %v587 = vsel %vm555, %v477, 0
        %v590 = vsel %vm555, %v478, 0
        %v593 = vsel %vm555, %v479, 0
        %v596 = vsel %vm555, %v480, 0
        %v599 = vsel %vm555, %v481, 0
        %v602 = vsel %vm555, %v482, 0
        %v605 = vsel %vm555, %v483, 0
        %v608 = vsel %vm555, %v484, 0
        %v611 = vsel %vm555, %v485, 0
        %v614 = vsel %vm555, %v486, 0
        %v617 = vsel %vm555, %v487, 0
        %v620 = vsel %vm555, %v488, 0
        %v623 = vsel %vm555, %v489, 0
        %v626 = vsel %vm555, %v490, 0
        %v629 = vsel %vm555, %v491, 0
        %v632 = vsel %vm555, %v492, 0
        %v635 = vsel %vm555, %v493, 0
        %v638 = vsel %vm555, %v494, 0
        %v641 = vsel %vm555, %v495, 0
        %v644 = vsel %vm555, %v496, 0
        %v647 = vsel %vm555, %v497, 0
        %v650 = vsel %vm555, %v498, 0
        %v653 = vsel %vm555, %v499, 0
        %v656 = vsel %vm555, %v500, 0
        %v659 = vsel %vm555, %v501, 0
        %v662 = vsel %vm555, %v502, 0
        %v665 = vsel %vm555, %v503, 0
        %v668 = vsel %vm555, %v504, 0
        %v671 = vsel %vm555, %v505, 0
        %v674 = vsel %vm555, %v506, 0
        %v677 = vsel %vm555, %v507, 0
        %v680 = vsel %vm555, %v508, 0
        %v683 = vsel %vm555, %v509, 0
        %v686 = vsel %vm555, %v510, 0
        %v689 = vsel %vm555, %v511, 0
        %v692 = vsel %vm555, %v512, 0
        %v695 = vsel %vm555, %v513, 0
        %v698 = vsel %vm555, %v514, 0
        %v701 = vsel %vm555, %v515, 0
        %v704 = vsel %vm555, %v516, 0
        %v707 = vsel %vm555, %v517, 0
        %v710 = vsel %vm555, %v518, 0
        %v713 = vsel %vm555, %v519, 0
        %v716 = vsel %vm555, %v520, 0
        %v719 = vsel %vm555, %v521, 0
        %v722 = vsel %vm555, %v522, 0
        %v725 = vsel %vm555, %v523, 0
        %v728 = vsel %vm555, %v524, 0
        %v731 = vsel %vm555, %v525, 0
        %v734 = vsel %vm555, %v526, 0
        %v737 = vsel %vm555, %v527, 0
        %v740 = vsel %vm555, %v528, 0
        %v743 = vsel %vm555, %v529, 0
        %v746 = vsel %vm555, %v530, 0
        %v749 = vsel %vm555, %v531, 0
        %v752 = vsel %vm555, %v532, 0
        %v755 = vsel %vm555, %v533, 0
        %v758 = vsel %vm555, %v534, 0
        %v761 = vsel %vm555, %v535, 0
        %v764 = vsel %vm555, %v536, 0
        %v767 = vsel %vm555, %v537, 0
        %v770 = vsel %vm555, %v538, 0
        %772 = vmatpush.xpose.msra.mxu0 %v626
        %773 = vmatpush.xpose.msra.mxu0 %v623
        %774 = vmatpush.xpose.msra.mxu0 %v620
        %775 = vmatpush.xpose.msra.mxu0 %v617
        %776 = vmatpush.xpose.msra.mxu0 %v614
        %777 = vmatpush.xpose.msra.mxu0 %v611
        %778 = vmatpush.xpose.msra.mxu0 %v608
        %779 = vmatpush.xpose.msra.mxu0 %v605
        %780 = vmatpush.xpose.msra.mxu0 %v602
        %781 = vmatpush.xpose.msra.mxu0 %v599
        %782 = vmatpush.xpose.msra.mxu0 %v596
        %783 = vmatpush.xpose.msra.mxu0 %v593
        %784 = vmatpush.xpose.msra.mxu0 %v590
        %785 = vmatpush.xpose.msra.mxu0 %v587
        %786 = vmatpush.xpose.msra.mxu0 %v584
        %787 = vmatpush.xpose.msra.mxu0 %v581
        %788 = vmatmul.f32.gmra.mxu0 %v557
        %v789 = vpop.f32.mrf.mxu0
        %v790 = vadd.f32 0.0, %v789
        %791 = vmatmul.f32.gmra.mxu0 %v560
        %v792 = vpop.f32.mrf.mxu0
        %v793 = vadd.f32 0.0, %v792
        %794 = vmatmul.f32.gmra.mxu0 %v563
        %v795 = vpop.f32.mrf.mxu0
        %v796 = vadd.f32 0.0, %v795
        %797 = vmatmul.f32.gmra.mxu0 %v566
        %v798 = vpop.f32.mrf.mxu0
        %v799 = vadd.f32 0.0, %v798
        %800 = vmatmul.f32.gmra.mxu0 %v569
        %v801 = vpop.f32.mrf.mxu0
        %v802 = vadd.f32 0.0, %v801
        %803 = vmatmul.f32.gmra.mxu0 %v572
        %v804 = vpop.f32.mrf.mxu0
        %v805 = vadd.f32 0.0, %v804
        %806 = vmatmul.f32.gmra.mxu0 %v575
        %v807 = vpop.f32.mrf.mxu0
        %v808 = vadd.f32 0.0, %v807
        %809 = vmatmul.f32.gmra.mxu0 %v578
        %v810 = vpop.f32.mrf.mxu0
        %v811 = vadd.f32 0.0, %v810
        %812 = vdwg.mxu0
        %813 = vmatpush.xpose.msra.mxu0 %v674
        %814 = vmatpush.xpose.msra.mxu0 %v671
        %815 = vmatpush.xpose.msra.mxu0 %v668
        %816 = vmatpush.xpose.msra.mxu0 %v665
        %817 = vmatpush.xpose.msra.mxu0 %v662
        %818 = vmatpush.xpose.msra.mxu0 %v659
        %819 = vmatpush.xpose.msra.mxu0 %v656
        %820 = vmatpush.xpose.msra.mxu0 %v653
        %821 = vmatpush.xpose.msra.mxu0 %v650
        %822 = vmatpush.xpose.msra.mxu0 %v647
        %823 = vmatpush.xpose.msra.mxu0 %v644
        %824 = vmatpush.xpose.msra.mxu0 %v641
        %825 = vmatpush.xpose.msra.mxu0 %v638
        %826 = vmatpush.xpose.msra.mxu0 %v635
        %827 = vmatpush.xpose.msra.mxu0 %v632
        %828 = vmatpush.xpose.msra.mxu0 %v629
        %829 = vmatmul.f32.gmra.mxu0 %v557
        %v830 = vpop.f32.mrf.mxu0
        %v831 = vadd.f32 0.0, %v830
        %832 = vmatmul.f32.gmra.mxu0 %v560
        %v833 = vpop.f32.mrf.mxu0
        %v834 = vadd.f32 0.0, %v833
        %835 = vmatmul.f32.gmra.mxu0 %v563
        %v836 = vpop.f32.mrf.mxu0
        %v837 = vadd.f32 0.0, %v836
        %838 = vmatmul.f32.gmra.mxu0 %v566
        %v839 = vpop.f32.mrf.mxu0
        %v840 = vadd.f32 0.0, %v839
        %841 = vmatmul.f32.gmra.mxu0 %v569
        %v842 = vpop.f32.mrf.mxu0
        %v843 = vadd.f32 0.0, %v842
        %844 = vmatmul.f32.gmra.mxu0 %v572
        %v845 = vpop.f32.mrf.mxu0
        %v846 = vadd.f32 0.0, %v845
        %847 = vmatmul.f32.gmra.mxu0 %v575
        %v848 = vpop.f32.mrf.mxu0
        %v849 = vadd.f32 0.0, %v848
        %850 = vmatmul.f32.gmra.mxu0 %v578
        %v851 = vpop.f32.mrf.mxu0
        %v852 = vadd.f32 0.0, %v851
        %853 = vdwg.mxu0
        %854 = vmatpush.xpose.msra.mxu0 %v722
        %855 = vmatpush.xpose.msra.mxu0 %v719
        %856 = vmatpush.xpose.msra.mxu0 %v716
        %857 = vmatpush.xpose.msra.mxu0 %v713
        %858 = vmatpush.xpose.msra.mxu0 %v710
        %859 = vmatpush.xpose.msra.mxu0 %v707
        %860 = vmatpush.xpose.msra.mxu0 %v704
        %861 = vmatpush.xpose.msra.mxu0 %v701
        %862 = vmatpush.xpose.msra.mxu0 %v698
        %863 = vmatpush.xpose.msra.mxu0 %v695
        %864 = vmatpush.xpose.msra.mxu0 %v692
        %865 = vmatpush.xpose.msra.mxu0 %v689
        %866 = vmatpush.xpose.msra.mxu0 %v686
        %867 = vmatpush.xpose.msra.mxu0 %v683
        %868 = vmatpush.xpose.msra.mxu0 %v680
        %869 = vmatpush.xpose.msra.mxu0 %v677
        %870 = vmatmul.f32.gmra.mxu0 %v557
        %v871 = vpop.f32.mrf.mxu0
        %v872 = vadd.f32 0.0, %v871
        %873 = vmatmul.f32.gmra.mxu0 %v560
        %v874 = vpop.f32.mrf.mxu0
        %v875 = vadd.f32 0.0, %v874
        %876 = vmatmul.f32.gmra.mxu0 %v563
        %v877 = vpop.f32.mrf.mxu0
        %v878 = vadd.f32 0.0, %v877
        %879 = vmatmul.f32.gmra.mxu0 %v566
        %v880 = vpop.f32.mrf.mxu0
        %v881 = vadd.f32 0.0, %v880
        %882 = vmatmul.f32.gmra.mxu0 %v569
        %v883 = vpop.f32.mrf.mxu0
        %v884 = vadd.f32 0.0, %v883
        %885 = vmatmul.f32.gmra.mxu0 %v572
        %v886 = vpop.f32.mrf.mxu0
        %v887 = vadd.f32 0.0, %v886
        %888 = vmatmul.f32.gmra.mxu0 %v575
        %v889 = vpop.f32.mrf.mxu0
        %v890 = vadd.f32 0.0, %v889
        %891 = vmatmul.f32.gmra.mxu0 %v578
        %v892 = vpop.f32.mrf.mxu0
        %v893 = vadd.f32 0.0, %v892
        %894 = vdwg.mxu0
        %895 = vmatpush.xpose.msra.mxu0 %v770
        %896 = vmatpush.xpose.msra.mxu0 %v767
        %897 = vmatpush.xpose.msra.mxu0 %v764
        %898 = vmatpush.xpose.msra.mxu0 %v761
        %899 = vmatpush.xpose.msra.mxu0 %v758
        %900 = vmatpush.xpose.msra.mxu0 %v755
        %901 = vmatpush.xpose.msra.mxu0 %v752
        %902 = vmatpush.xpose.msra.mxu0 %v749
        %903 = vmatpush.xpose.msra.mxu0 %v746
        %904 = vmatpush.xpose.msra.mxu0 %v743
        %905 = vmatpush.xpose.msra.mxu0 %v740
        %906 = vmatpush.xpose.msra.mxu0 %v737
        %907 = vmatpush.xpose.msra.mxu0 %v734
        %908 = vmatpush.xpose.msra.mxu0 %v731
        %909 = vmatpush.xpose.msra.mxu0 %v728
        %910 = vmatpush.xpose.msra.mxu0 %v725
        %911 = vmatmul.f32.gmra.mxu0 %v557
        %v912 = vpop.f32.mrf.mxu0
        %v913 = vadd.f32 0.0, %v912
        %914 = vmatmul.f32.gmra.mxu0 %v560
        %v915 = vpop.f32.mrf.mxu0
        %v916 = vadd.f32 0.0, %v915
        %917 = vmatmul.f32.gmra.mxu0 %v563
        %v918 = vpop.f32.mrf.mxu0
        %v919 = vadd.f32 0.0, %v918
        %920 = vmatmul.f32.gmra.mxu0 %v566
        %v921 = vpop.f32.mrf.mxu0
        %v922 = vadd.f32 0.0, %v921
        %923 = vmatmul.f32.gmra.mxu0 %v569
        %v924 = vpop.f32.mrf.mxu0
        %v925 = vadd.f32 0.0, %v924
        %926 = vmatmul.f32.gmra.mxu0 %v572
        %v927 = vpop.f32.mrf.mxu0
        %v928 = vadd.f32 0.0, %v927
        %929 = vmatmul.f32.gmra.mxu0 %v575
        %v930 = vpop.f32.mrf.mxu0
        %v931 = vadd.f32 0.0, %v930
        %932 = vmatmul.f32.gmra.mxu0 %v578
        %v933 = vpop.f32.mrf.mxu0
        %v934 = vadd.f32 0.0, %v933
        %935 = vdwg.mxu0
        %v937 = vsel %vm555, %v539, 0
        %v940 = vsel %vm555, %v540, 0
        %v943 = vsel %vm555, %v541, 0
        %v946 = vsel %vm555, %v542, 0
        %v949 = vsel %vm555, %v543, 0
        %v952 = vsel %vm555, %v544, 0
        %v955 = vsel %vm555, %v545, 0
        %v958 = vsel %vm555, %v546, 0
        %v961 = vsel %vm555, %v411, 0
        %v964 = vsel %vm555, %v412, 0
        %v967 = vsel %vm555, %v413, 0
        %v970 = vsel %vm555, %v414, 0
        %v973 = vsel %vm555, %v415, 0
        %v976 = vsel %vm555, %v416, 0
        %v979 = vsel %vm555, %v417, 0
        %v982 = vsel %vm555, %v418, 0
        %v985 = vsel %vm555, %v419, 0
        %v988 = vsel %vm555, %v420, 0
        %v991 = vsel %vm555, %v421, 0
        %v994 = vsel %vm555, %v422, 0
        %v997 = vsel %vm555, %v423, 0
        %v1000 = vsel %vm555, %v424, 0
        %v1003 = vsel %vm555, %v425, 0
        %v1006 = vsel %vm555, %v426, 0
        %v1009 = vsel %vm555, %v427, 0
        %v1012 = vsel %vm555, %v428, 0
        %v1015 = vsel %vm555, %v429, 0
        %v1018 = vsel %vm555, %v430, 0
        %v1021 = vsel %vm555, %v431, 0
        %v1024 = vsel %vm555, %v432, 0
        %v1027 = vsel %vm555, %v433, 0
        %v1030 = vsel %vm555, %v434, 0
        %v1033 = vsel %vm555, %v435, 0
        %v1036 = vsel %vm555, %v436, 0
        %v1039 = vsel %vm555, %v437, 0
        %v1042 = vsel %vm555, %v438, 0
        %v1045 = vsel %vm555, %v439, 0
        %v1048 = vsel %vm555, %v440, 0
        %v1051 = vsel %vm555, %v441, 0
        %v1054 = vsel %vm555, %v442, 0
        %v1057 = vsel %vm555, %v443, 0
        %v1060 = vsel %vm555, %v444, 0
        %v1063 = vsel %vm555, %v445, 0
        %v1066 = vsel %vm555, %v446, 0
        %v1069 = vsel %vm555, %v447, 0
        %v1072 = vsel %vm555, %v448, 0
        %v1075 = vsel %vm555, %v449, 0
        %v1078 = vsel %vm555, %v450, 0
        %v1081 = vsel %vm555, %v451, 0
        %v1084 = vsel %vm555, %v452, 0
        %v1087 = vsel %vm555, %v453, 0
        %v1090 = vsel %vm555, %v454, 0
        %v1093 = vsel %vm555, %v455, 0
        %v1096 = vsel %vm555, %v456, 0
        %v1099 = vsel %vm555, %v457, 0
        %v1102 = vsel %vm555, %v458, 0
        %v1105 = vsel %vm555, %v459, 0
        %v1108 = vsel %vm555, %v460, 0
        %v1111 = vsel %vm555, %v461, 0
        %v1114 = vsel %vm555, %v462, 0
        %v1117 = vsel %vm555, %v463, 0
        %v1120 = vsel %vm555, %v464, 0
        %v1123 = vsel %vm555, %v465, 0
        %v1126 = vsel %vm555, %v466, 0
        %v1129 = vsel %vm555, %v467, 0
        %v1132 = vsel %vm555, %v468, 0
        %v1135 = vsel %vm555, %v469, 0
        %v1138 = vsel %vm555, %v470, 0
        %v1141 = vsel %vm555, %v471, 0
        %v1144 = vsel %vm555, %v472, 0
        %v1147 = vsel %vm555, %v473, 0
        %v1150 = vsel %vm555, %v474, 0
        %1152 = vmatpush.xpose.msra.mxu0 %v1006
        %1153 = vmatpush.xpose.msra.mxu0 %v1003
        %1154 = vmatpush.xpose.msra.mxu0 %v1000
        %1155 = vmatpush.xpose.msra.mxu0 %v997
        %1156 = vmatpush.xpose.msra.mxu0 %v994
        %1157 = vmatpush.xpose.msra.mxu0 %v991
        %1158 = vmatpush.xpose.msra.mxu0 %v988
        %1159 = vmatpush.xpose.msra.mxu0 %v985
        %1160 = vmatpush.xpose.msra.mxu0 %v982
        %1161 = vmatpush.xpose.msra.mxu0 %v979
        %1162 = vmatpush.xpose.msra.mxu0 %v976
        %1163 = vmatpush.xpose.msra.mxu0 %v973
        %1164 = vmatpush.xpose.msra.mxu0 %v970
        %1165 = vmatpush.xpose.msra.mxu0 %v967
        %1166 = vmatpush.xpose.msra.mxu0 %v964
        %1167 = vmatpush.xpose.msra.mxu0 %v961
        %1168 = vmatmul.f32.gmra.mxu0 %v937
        %v1169 = vpop.f32.mrf.mxu0
        %v1170 = vadd.f32 %v790, %v1169
        %1171 = vmatmul.f32.gmra.mxu0 %v940
        %v1172 = vpop.f32.mrf.mxu0
        %v1173 = vadd.f32 %v793, %v1172
        %1174 = vmatmul.f32.gmra.mxu0 %v943
        %v1175 = vpop.f32.mrf.mxu0
        %v1176 = vadd.f32 %v796, %v1175
        %1177 = vmatmul.f32.gmra.mxu0 %v946
        %v1178 = vpop.f32.mrf.mxu0
        %v1179 = vadd.f32 %v799, %v1178
        %1180 = vmatmul.f32.gmra.mxu0 %v949
        %v1181 = vpop.f32.mrf.mxu0
        %v1182 = vadd.f32 %v802, %v1181
        %1183 = vmatmul.f32.gmra.mxu0 %v952
        %v1184 = vpop.f32.mrf.mxu0
        %v1185 = vadd.f32 %v805, %v1184
        %1186 = vmatmul.f32.gmra.mxu0 %v955
        %v1187 = vpop.f32.mrf.mxu0
        %v1188 = vadd.f32 %v808, %v1187
        %1189 = vmatmul.f32.gmra.mxu0 %v958
        %v1190 = vpop.f32.mrf.mxu0
        %v1191 = vadd.f32 %v811, %v1190
        %1192 = vdwg.mxu0
        %1193 = vmatpush.xpose.msra.mxu0 %v1054
        %1194 = vmatpush.xpose.msra.mxu0 %v1051
        %1195 = vmatpush.xpose.msra.mxu0 %v1048
        %1196 = vmatpush.xpose.msra.mxu0 %v1045
        %1197 = vmatpush.xpose.msra.mxu0 %v1042
        %1198 = vmatpush.xpose.msra.mxu0 %v1039
        %1199 = vmatpush.xpose.msra.mxu0 %v1036
        %1200 = vmatpush.xpose.msra.mxu0 %v1033
        %1201 = vmatpush.xpose.msra.mxu0 %v1030
        %1202 = vmatpush.xpose.msra.mxu0 %v1027
        %1203 = vmatpush.xpose.msra.mxu0 %v1024
        %1204 = vmatpush.xpose.msra.mxu0 %v1021
        %1205 = vmatpush.xpose.msra.mxu0 %v1018
        %1206 = vmatpush.xpose.msra.mxu0 %v1015
        %1207 = vmatpush.xpose.msra.mxu0 %v1012
        %1208 = vmatpush.xpose.msra.mxu0 %v1009
        %1209 = vmatmul.f32.gmra.mxu0 %v937
        %v1210 = vpop.f32.mrf.mxu0
        %v1211 = vadd.f32 %v831, %v1210
        %1212 = vmatmul.f32.gmra.mxu0 %v940
        %v1213 = vpop.f32.mrf.mxu0
        %v1214 = vadd.f32 %v834, %v1213
        %1215 = vmatmul.f32.gmra.mxu0 %v943
        %v1216 = vpop.f32.mrf.mxu0
        %v1217 = vadd.f32 %v837, %v1216
        %1218 = vmatmul.f32.gmra.mxu0 %v946
        %v1219 = vpop.f32.mrf.mxu0
        %v1220 = vadd.f32 %v840, %v1219
        %1221 = vmatmul.f32.gmra.mxu0 %v949
        %v1222 = vpop.f32.mrf.mxu0
        %v1223 = vadd.f32 %v843, %v1222
        %1224 = vmatmul.f32.gmra.mxu0 %v952
        %v1225 = vpop.f32.mrf.mxu0
        %v1226 = vadd.f32 %v846, %v1225
        %1227 = vmatmul.f32.gmra.mxu0 %v955
        %v1228 = vpop.f32.mrf.mxu0
        %v1229 = vadd.f32 %v849, %v1228
        %1230 = vmatmul.f32.gmra.mxu0 %v958
        %v1231 = vpop.f32.mrf.mxu0
        %v1232 = vadd.f32 %v852, %v1231
        %1233 = vdwg.mxu0
        %1234 = vmatpush.xpose.msra.mxu0 %v1102
        %1235 = vmatpush.xpose.msra.mxu0 %v1099
        %1236 = vmatpush.xpose.msra.mxu0 %v1096
        %1237 = vmatpush.xpose.msra.mxu0 %v1093
        %1238 = vmatpush.xpose.msra.mxu0 %v1090
        %1239 = vmatpush.xpose.msra.mxu0 %v1087
        %1240 = vmatpush.xpose.msra.mxu0 %v1084
        %1241 = vmatpush.xpose.msra.mxu0 %v1081
        %1242 = vmatpush.xpose.msra.mxu0 %v1078
        %1243 = vmatpush.xpose.msra.mxu0 %v1075
        %1244 = vmatpush.xpose.msra.mxu0 %v1072
        %1245 = vmatpush.xpose.msra.mxu0 %v1069
        %1246 = vmatpush.xpose.msra.mxu0 %v1066
        %1247 = vmatpush.xpose.msra.mxu0 %v1063
        %1248 = vmatpush.xpose.msra.mxu0 %v1060
        %1249 = vmatpush.xpose.msra.mxu0 %v1057
        %1250 = vmatmul.f32.gmra.mxu0 %v937
        %v1251 = vpop.f32.mrf.mxu0
        %v1252 = vadd.f32 %v872, %v1251
        %1253 = vmatmul.f32.gmra.mxu0 %v940
        %v1254 = vpop.f32.mrf.mxu0
        %v1255 = vadd.f32 %v875, %v1254
        %1256 = vmatmul.f32.gmra.mxu0 %v943
        %v1257 = vpop.f32.mrf.mxu0
        %v1258 = vadd.f32 %v878, %v1257
        %1259 = vmatmul.f32.gmra.mxu0 %v946
        %v1260 = vpop.f32.mrf.mxu0
        %v1261 = vadd.f32 %v881, %v1260
        %1262 = vmatmul.f32.gmra.mxu0 %v949
        %v1263 = vpop.f32.mrf.mxu0
        %v1264 = vadd.f32 %v884, %v1263
        %1265 = vmatmul.f32.gmra.mxu0 %v952
        %v1266 = vpop.f32.mrf.mxu0
        %v1267 = vadd.f32 %v887, %v1266
        %1268 = vmatmul.f32.gmra.mxu0 %v955
        %v1269 = vpop.f32.mrf.mxu0
        %v1270 = vadd.f32 %v890, %v1269
        %1271 = vmatmul.f32.gmra.mxu0 %v958
        %v1272 = vpop.f32.mrf.mxu0
        %v1273 = vadd.f32 %v893, %v1272
        %1274 = vdwg.mxu0
        %1275 = vmatpush.xpose.msra.mxu0 %v1150
        %1276 = vmatpush.xpose.msra.mxu0 %v1147
        %1277 = vmatpush.xpose.msra.mxu0 %v1144
        %1278 = vmatpush.xpose.msra.mxu0 %v1141
        %1279 = vmatpush.xpose.msra.mxu0 %v1138
        %1280 = vmatpush.xpose.msra.mxu0 %v1135
        %1281 = vmatpush.xpose.msra.mxu0 %v1132
        %1282 = vmatpush.xpose.msra.mxu0 %v1129
        %1283 = vmatpush.xpose.msra.mxu0 %v1126
        %1284 = vmatpush.xpose.msra.mxu0 %v1123
        %1285 = vmatpush.xpose.msra.mxu0 %v1120
        %1286 = vmatpush.xpose.msra.mxu0 %v1117
        %1287 = vmatpush.xpose.msra.mxu0 %v1114
        %1288 = vmatpush.xpose.msra.mxu0 %v1111
        %1289 = vmatpush.xpose.msra.mxu0 %v1108
        %1290 = vmatpush.xpose.msra.mxu0 %v1105
        %1291 = vmatmul.f32.gmra.mxu0 %v937
        %v1292 = vpop.f32.mrf.mxu0
        %v1293 = vadd.f32 %v913, %v1292
        %1294 = vmatmul.f32.gmra.mxu0 %v940
        %v1295 = vpop.f32.mrf.mxu0
        %v1296 = vadd.f32 %v916, %v1295
        %1297 = vmatmul.f32.gmra.mxu0 %v943
        %v1298 = vpop.f32.mrf.mxu0
        %v1299 = vadd.f32 %v919, %v1298
        %1300 = vmatmul.f32.gmra.mxu0 %v946
        %v1301 = vpop.f32.mrf.mxu0
        %v1302 = vadd.f32 %v922, %v1301
        %1303 = vmatmul.f32.gmra.mxu0 %v949
        %v1304 = vpop.f32.mrf.mxu0
        %v1305 = vadd.f32 %v925, %v1304
        %1306 = vmatmul.f32.gmra.mxu0 %v952
        %v1307 = vpop.f32.mrf.mxu0
        %v1308 = vadd.f32 %v928, %v1307
        %1309 = vmatmul.f32.gmra.mxu0 %v955
        %v1310 = vpop.f32.mrf.mxu0
        %v1311 = vadd.f32 %v931, %v1310
        %1312 = vmatmul.f32.gmra.mxu0 %v958
        %v1313 = vpop.f32.mrf.mxu0
        %v1314 = vadd.f32 %v934, %v1313
        %1315 = vdwg.mxu0
        %v1316 = vld [vmem:[%s4] sm:$0xff]
        %v1317 = vld [vmem:[%s4 + $0x8] sm:$0xff]
        %v1318 = vld [vmem:[%s4 + $0x10] sm:$0xff]
        %v1319 = vld [vmem:[%s4 + $0x18] sm:$0xff]
        %v1320 = vld [vmem:[%s4 + $0x20] sm:$0xff]
        %v1321 = vld [vmem:[%s4 + $0x28] sm:$0xff]
        %v1322 = vld [vmem:[%s4 + $0x30] sm:$0xff]
        %v1323 = vld [vmem:[%s4 + $0x38] sm:$0xff]
        %1325 = vset.pattern.permute.xlu0 0
        %1326 = vperm.xlu0 %1325, %v1316
        %v1327 = vpop.permute.xlu0 %1326
        %1330 = vset.pattern.permute.xlu0 0
        %1331 = vperm.xlu0 %1330, %v1317
        %v1332 = vpop.permute.xlu0 %1331
        %1335 = vset.pattern.permute.xlu0 0
        %1336 = vperm.xlu0 %1335, %v1318
        %v1337 = vpop.permute.xlu0 %1336
        %1340 = vset.pattern.permute.xlu0 0
        %1341 = vperm.xlu0 %1340, %v1319
        %v1342 = vpop.permute.xlu0 %1341
        %1345 = vset.pattern.permute.xlu0 0
        %1346 = vperm.xlu0 %1345, %v1320
        %v1347 = vpop.permute.xlu0 %1346
        %1350 = vset.pattern.permute.xlu0 0
        %1351 = vperm.xlu0 %1350, %v1321
        %v1352 = vpop.permute.xlu0 %1351
        %1355 = vset.pattern.permute.xlu0 0
        %1356 = vperm.xlu0 %1355, %v1322
        %v1357 = vpop.permute.xlu0 %1356
        %1360 = vset.pattern.permute.xlu0 0
        %1361 = vperm.xlu0 %1360, %v1323
        %v1362 = vpop.permute.xlu0 %1361
        %v1364 = vadd.f32 %v1170, %v1327
        %v1365 = vadd.f32 %v1211, %v1327
        %v1366 = vadd.f32 %v1252, %v1327
        %v1367 = vadd.f32 %v1293, %v1327
        %v1368 = vadd.f32 %v1173, %v1332
        %v1369 = vadd.f32 %v1214, %v1332
        %v1370 = vadd.f32 %v1255, %v1332
        %v1371 = vadd.f32 %v1296, %v1332
        %v1372 = vadd.f32 %v1176, %v1337
        %v1373 = vadd.f32 %v1217, %v1337
        %v1374 = vadd.f32 %v1258, %v1337
        %v1375 = vadd.f32 %v1299, %v1337
        %v1376 = vadd.f32 %v1179, %v1342
        %v1377 = vadd.f32 %v1220, %v1342
        %v1378 = vadd.f32 %v1261, %v1342
        %v1379 = vadd.f32 %v1302, %v1342
        %v1380 = vadd.f32 %v1182, %v1347
        %v1381 = vadd.f32 %v1223, %v1347
        %v1382 = vadd.f32 %v1264, %v1347
        %v1383 = vadd.f32 %v1305, %v1347
        %v1384 = vadd.f32 %v1185, %v1352
        %v1385 = vadd.f32 %v1226, %v1352
        %v1386 = vadd.f32 %v1267, %v1352
        %v1387 = vadd.f32 %v1308, %v1352
        %v1388 = vadd.f32 %v1188, %v1357
        %v1389 = vadd.f32 %v1229, %v1357
        %v1390 = vadd.f32 %v1270, %v1357
        %v1391 = vadd.f32 %v1311, %v1357
        %v1392 = vadd.f32 %v1191, %v1362
        %v1393 = vadd.f32 %v1232, %v1362
        %v1394 = vadd.f32 %v1273, %v1362
        %v1395 = vadd.f32 %v1314, %v1362
        %v1396 = vmul.f32 %v1364, %v1364
        %v1397 = vmul.f32 %v1365, %v1365
        %v1398 = vmul.f32 %v1366, %v1366
        %v1399 = vmul.f32 %v1367, %v1367
        %v1400 = vmul.f32 %v1368, %v1368
        %v1401 = vmul.f32 %v1369, %v1369
        %v1402 = vmul.f32 %v1370, %v1370
        %v1403 = vmul.f32 %v1371, %v1371
        %v1404 = vmul.f32 %v1372, %v1372
        %v1405 = vmul.f32 %v1373, %v1373
        %v1406 = vmul.f32 %v1374, %v1374
        %v1407 = vmul.f32 %v1375, %v1375
        %v1408 = vmul.f32 %v1376, %v1376
        %v1409 = vmul.f32 %v1377, %v1377
        %v1410 = vmul.f32 %v1378, %v1378
        %v1411 = vmul.f32 %v1379, %v1379
        %v1412 = vmul.f32 %v1380, %v1380
        %v1413 = vmul.f32 %v1381, %v1381
        %v1414 = vmul.f32 %v1382, %v1382
        %v1415 = vmul.f32 %v1383, %v1383
        %v1416 = vmul.f32 %v1384, %v1384
        %v1417 = vmul.f32 %v1385, %v1385
        %v1418 = vmul.f32 %v1386, %v1386
        %v1419 = vmul.f32 %v1387, %v1387
        %v1420 = vmul.f32 %v1388, %v1388
        %v1421 = vmul.f32 %v1389, %v1389
        %v1422 = vmul.f32 %v1390, %v1390
        %v1423 = vmul.f32 %v1391, %v1391
        %v1424 = vmul.f32 %v1392, %v1392
        %v1425 = vmul.f32 %v1393, %v1393
        %v1426 = vmul.f32 %v1394, %v1394
        %v1427 = vmul.f32 %v1395, %v1395
        %v1428 = vadd.f32 %v1396, %v1412
        %v1429 = vadd.f32 %v1397, %v1413
        %v1430 = vadd.f32 %v1398, %v1414
        %v1431 = vadd.f32 %v1399, %v1415
        %v1432 = vadd.f32 %v1400, %v1416
        %v1433 = vadd.f32 %v1401, %v1417
        %v1434 = vadd.f32 %v1402, %v1418
        %v1435 = vadd.f32 %v1403, %v1419
        %v1436 = vadd.f32 %v1404, %v1420
        %v1437 = vadd.f32 %v1405, %v1421
        %v1438 = vadd.f32 %v1406, %v1422
        %v1439 = vadd.f32 %v1407, %v1423
        %v1440 = vadd.f32 %v1408, %v1424
        %v1441 = vadd.f32 %v1409, %v1425
        %v1442 = vadd.f32 %v1410, %v1426
        %v1443 = vadd.f32 %v1411, %v1427
        %v1444 = vld [vmem:[%s5] sm:$0xff]
        %v1445 = vld [vmem:[%s5 + $0x8] sm:$0xff]
        %v1446 = vld [vmem:[%s5 + $0x10] sm:$0xff]
        %v1447 = vld [vmem:[%s5 + $0x18] sm:$0xff]
        %v1448 = vld [vmem:[%s6] sm:$0xff]
        %v1449 = vld [vmem:[%s6 + $0x8] sm:$0xff]
        %v1450 = vld [vmem:[%s6 + $0x10] sm:$0xff]
        %v1451 = vld [vmem:[%s6 + $0x18] sm:$0xff]
        %1453 = vset.pattern.permute.xlu0 0
        %1454 = vperm.xlu0 %1453, %v1448
        %v1455 = vpop.permute.xlu0 %1454
        %1458 = vset.pattern.permute.xlu0 0
        %1459 = vperm.xlu0 %1458, %v1449
        %v1460 = vpop.permute.xlu0 %1459
        %1463 = vset.pattern.permute.xlu0 0
        %1464 = vperm.xlu0 %1463, %v1450
        %v1465 = vpop.permute.xlu0 %1464
        %1468 = vset.pattern.permute.xlu0 0
        %1469 = vperm.xlu0 %1468, %v1451
        %v1470 = vpop.permute.xlu0 %1469
        %vm1472 = vcmask 261120
        %v1474 = vsel %vm1472, %v1444, 0
        %v1477 = vsel %vm1472, %v1445, 0
        %v1480 = vsel %vm1472, %v1446, 0
        %v1483 = vsel %vm1472, %v1447, 0
        %1485 = vmatpush.msra.mxu0 0.0
        %1486 = vmatpush.msra.mxu0 0.0
        %1487 = vmatpush.msra.mxu0 0.0
        %1488 = vmatpush.msra.mxu0 0.0
        %1489 = vmatpush.msra.mxu0 0.0
        %1490 = vmatpush.msra.mxu0 0.0
        %1491 = vmatpush.msra.mxu0 0.0
        %1492 = vmatpush.msra.mxu0 0.0
        %1493 = vmatpush.msra.mxu0 0.0
        %1494 = vmatpush.msra.mxu0 0.0
        %1495 = vmatpush.msra.mxu0 0.0
        %1496 = vmatpush.msra.mxu0 0.0
        %1497 = vmatpush.msra.mxu0 %v1440
        %1498 = vmatpush.msra.mxu0 %v1436
        %1499 = vmatpush.msra.mxu0 %v1432
        %1500 = vmatpush.msra.mxu0 %v1428
        %1501 = vmatmul.f32.gmra.mxu0 %v1474
        %v1502 = vpop.f32.mrf.mxu0
        %v1503 = vadd.f32 %v1455, %v1502
        %1504 = vmatmul.f32.gmra.mxu0 %v1477
        %v1505 = vpop.f32.mrf.mxu0
        %v1506 = vadd.f32 %v1460, %v1505
        %1507 = vmatmul.f32.gmra.mxu0 %v1480
        %v1508 = vpop.f32.mrf.mxu0
        %v1509 = vadd.f32 %v1465, %v1508
        %1510 = vmatmul.f32.gmra.mxu0 %v1483
        %v1511 = vpop.f32.mrf.mxu0
        %v1512 = vadd.f32 %v1470, %v1511
        %1513 = vdwg.mxu0
        %1514 = vmatpush.msra.mxu0 0.0
        %1515 = vmatpush.msra.mxu0 0.0
        %1516 = vmatpush.msra.mxu0 0.0
        %1517 = vmatpush.msra.mxu0 0.0
        %1518 = vmatpush.msra.mxu0 0.0
        %1519 = vmatpush.msra.mxu0 0.0
        %1520 = vmatpush.msra.mxu0 0.0
        %1521 = vmatpush.msra.mxu0 0.0
        %1522 = vmatpush.msra.mxu0 0.0
        %1523 = vmatpush.msra.mxu0 0.0
        %1524 = vmatpush.msra.mxu0 0.0
        %1525 = vmatpush.msra.mxu0 0.0
        %1526 = vmatpush.msra.mxu0 %v1441
        %1527 = vmatpush.msra.mxu0 %v1437
        %1528 = vmatpush.msra.mxu0 %v1433
        %1529 = vmatpush.msra.mxu0 %v1429
        %1530 = vmatmul.f32.gmra.mxu0 %v1474
        %v1531 = vpop.f32.mrf.mxu0
        %v1532 = vadd.f32 %v1455, %v1531
        %1533 = vmatmul.f32.gmra.mxu0 %v1477
        %v1534 = vpop.f32.mrf.mxu0
        %v1535 = vadd.f32 %v1460, %v1534
        %1536 = vmatmul.f32.gmra.mxu0 %v1480
        %v1537 = vpop.f32.mrf.mxu0
        %v1538 = vadd.f32 %v1465, %v1537
        %1539 = vmatmul.f32.gmra.mxu0 %v1483
        %v1540 = vpop.f32.mrf.mxu0
        %v1541 = vadd.f32 %v1470, %v1540
        %1542 = vdwg.mxu0
        %1543 = vmatpush.msra.mxu0 0.0
        %1544 = vmatpush.msra.mxu0 0.0
        %1545 = vmatpush.msra.mxu0 0.0
        %1546 = vmatpush.msra.mxu0 0.0
        %1547 = vmatpush.msra.mxu0 0.0
        %1548 = vmatpush.msra.mxu0 0.0
        %1549 = vmatpush.msra.mxu0 0.0
        %1550 = vmatpush.msra.mxu0 0.0
        %1551 = vmatpush.msra.mxu0 0.0
        %1552 = vmatpush.msra.mxu0 0.0
        %1553 = vmatpush.msra.mxu0 0.0
        %1554 = vmatpush.msra.mxu0 0.0
        %1555 = vmatpush.msra.mxu0 %v1442
        %1556 = vmatpush.msra.mxu0 %v1438
        %1557 = vmatpush.msra.mxu0 %v1434
        %1558 = vmatpush.msra.mxu0 %v1430
        %1559 = vmatmul.f32.gmra.mxu0 %v1474
        %v1560 = vpop.f32.mrf.mxu0
        %v1561 = vadd.f32 %v1455, %v1560
        %1562 = vmatmul.f32.gmra.mxu0 %v1477
        %v1563 = vpop.f32.mrf.mxu0
        %v1564 = vadd.f32 %v1460, %v1563
        %1565 = vmatmul.f32.gmra.mxu0 %v1480
        %v1566 = vpop.f32.mrf.mxu0
        %v1567 = vadd.f32 %v1465, %v1566
        %1568 = vmatmul.f32.gmra.mxu0 %v1483
        %v1569 = vpop.f32.mrf.mxu0
        %v1570 = vadd.f32 %v1470, %v1569
        %1571 = vdwg.mxu0
        %1572 = vmatpush.msra.mxu0 0.0
        %1573 = vmatpush.msra.mxu0 0.0
        %1574 = vmatpush.msra.mxu0 0.0
        %1575 = vmatpush.msra.mxu0 0.0
        %1576 = vmatpush.msra.mxu0 0.0
        %1577 = vmatpush.msra.mxu0 0.0
        %1578 = vmatpush.msra.mxu0 0.0
        %1579 = vmatpush.msra.mxu0 0.0
        %1580 = vmatpush.msra.mxu0 0.0
        %1581 = vmatpush.msra.mxu0 0.0
        %1582 = vmatpush.msra.mxu0 0.0
        %1583 = vmatpush.msra.mxu0 0.0
        %1584 = vmatpush.msra.mxu0 %v1443
        %1585 = vmatpush.msra.mxu0 %v1439
        %1586 = vmatpush.msra.mxu0 %v1435
        %1587 = vmatpush.msra.mxu0 %v1431
        %1588 = vmatmul.f32.gmra.mxu0 %v1474
        %v1589 = vpop.f32.mrf.mxu0
        %v1590 = vadd.f32 %v1455, %v1589
        %1591 = vmatmul.f32.gmra.mxu0 %v1477
        %v1592 = vpop.f32.mrf.mxu0
        %v1593 = vadd.f32 %v1460, %v1592
        %1594 = vmatmul.f32.gmra.mxu0 %v1480
        %v1595 = vpop.f32.mrf.mxu0
        %v1596 = vadd.f32 %v1465, %v1595
        %1597 = vmatmul.f32.gmra.mxu0 %v1483
        %v1598 = vpop.f32.mrf.mxu0
        %v1599 = vadd.f32 %v1470, %v1598
        %1600 = vdwg.mxu0
        %1601 = vst [vmem:[%s366] sm:$0xff] %v1364
        %1602 = vst [vmem:[%s366 + $0x8] sm:$0xff] %v1365
        %1603 = vst [vmem:[%s366 + $0x10] sm:$0xff] %v1366
        %1604 = vst [vmem:[%s366 + $0x18] sm:$0xff] %v1367
        %1605 = vst [vmem:[%s366 + $0x20] sm:$0xff] %v1368
        %1606 = vst [vmem:[%s366 + $0x28] sm:$0xff] %v1369
        %1607 = vst [vmem:[%s366 + $0x30] sm:$0xff] %v1370
        %1608 = vst [vmem:[%s366 + $0x38] sm:$0xff] %v1371
        %1609 = vst [vmem:[%s366 + $0x40] sm:$0x1] %v1372
        %1610 = vst [vmem:[%s366 + $0x48] sm:$0x1] %v1373
        %1611 = vst [vmem:[%s366 + $0x50] sm:$0x1] %v1374
        %1612 = vst [vmem:[%s366 + $0x58] sm:$0x1] %v1375
        %s1613 = scalar_lea.vmem %s366, 96 [#allocation2]
        %1614 = vst [vmem:[%s1613] sm:$0xff] %v1380
        %1615 = vst [vmem:[%s1613 + $0x8] sm:$0xff] %v1381
        %1616 = vst [vmem:[%s1613 + $0x10] sm:$0xff] %v1382
        %1617 = vst [vmem:[%s1613 + $0x18] sm:$0xff] %v1383
        %1618 = vst [vmem:[%s1613 + $0x20] sm:$0xff] %v1384
        %1619 = vst [vmem:[%s1613 + $0x28] sm:$0xff] %v1385
        %1620 = vst [vmem:[%s1613 + $0x30] sm:$0xff] %v1386
        %1621 = vst [vmem:[%s1613 + $0x38] sm:$0xff] %v1387
        %1622 = vst [vmem:[%s1613 + $0x40] sm:$0x1] %v1388
        %1623 = vst [vmem:[%s1613 + $0x48] sm:$0x1] %v1389
        %1624 = vst [vmem:[%s1613 + $0x50] sm:$0x1] %v1390
        %1625 = vst [vmem:[%s1613 + $0x58] sm:$0x1] %v1391
        %1626 = vst [vmem:[%s373] sm:$0xff] %v1428
        %1627 = vst [vmem:[%s373 + $0x8] sm:$0xff] %v1429
        %1628 = vst [vmem:[%s373 + $0x10] sm:$0xff] %v1430
        %1629 = vst [vmem:[%s373 + $0x18] sm:$0xff] %v1431
        %1630 = vst [vmem:[%s373 + $0x20] sm:$0xff] %v1432
        %1631 = vst [vmem:[%s373 + $0x28] sm:$0xff] %v1433
        %1632 = vst [vmem:[%s373 + $0x30] sm:$0xff] %v1434
        %1633 = vst [vmem:[%s373 + $0x38] sm:$0xff] %v1435
        %1634 = vst [vmem:[%s373 + $0x40] sm:$0x1] %v1436
        %1635 = vst [vmem:[%s373 + $0x48] sm:$0x1] %v1437
        %1636 = vst [vmem:[%s373 + $0x50] sm:$0x1] %v1438
        %1637 = vst [vmem:[%s373 + $0x58] sm:$0x1] %v1439
        %1638 = vst [vmem:[%s379] sm:$0xff] %v1503
        %1639 = vst [vmem:[%s379 + $0x8] sm:$0xff] %v1532
        %1640 = vst [vmem:[%s379 + $0x10] sm:$0xff] %v1561
        %1641 = vst [vmem:[%s379 + $0x18] sm:$0xff] %v1590
        %1642 = vst [vmem:[%s379 + $0x20] sm:$0xff] %v1506
        %1643 = vst [vmem:[%s379 + $0x28] sm:$0xff] %v1535
        %1644 = vst [vmem:[%s379 + $0x30] sm:$0xff] %v1564
        %1645 = vst [vmem:[%s379 + $0x38] sm:$0xff] %v1593
        %1646 = vst [vmem:[%s379 + $0x40] sm:$0xff] %v1509
        %1647 = vst [vmem:[%s379 + $0x48] sm:$0xff] %v1538
        %1648 = vst [vmem:[%s379 + $0x50] sm:$0xff] %v1567
        %1649 = vst [vmem:[%s379 + $0x58] sm:$0xff] %v1596
        %1650 = vst [vmem:[%s379 + $0x60] sm:$0xff] %v1512
        %1651 = vst [vmem:[%s379 + $0x68] sm:$0xff] %v1541
        %1652 = vst [vmem:[%s379 + $0x70] sm:$0xff] %v1570
        %1653 = vst [vmem:[%s379 + $0x78] sm:$0xff] %v1599
        %s1654 = sand.u32 %s189, 1
        %s1655 = sand.u32 %s189, 1
        %s1656 = smul.addr %s1655, 192
        %s1657 = scalar_lea.vmem [#allocation2], %s1656
        %s1658 = sand.u32 %s215, 1
        %s1659 = scalar_lea.sflag [#allocation4], %s1658
        %s1660 = sand.u32 %s215, 1
        %s1661 = smul.addr %s1660, 96
        %s1662 = scalar_lea.vmem [#allocation3], %s1661
        %s1663 = sand.u32 %s241, 1
        %s1664 = sand.u32 %s241, 1
        %s1665 = smul.addr %s1664, 128
        %s1666 = scalar_lea.vmem [#allocation5], %s1665
        // Predicated region
        $region49: #{conv_dft_forward.1} parent=47 // pred_check
          %p1667 = pneg %p199
        $region50: #{conv_dft_forward.1} parent=47 // pred_check_branch
          %1669 = sbr.rel (%p1667) target = $region52
        $region51: #{conv_dft_forward.1} parent=47 // pred_region
          %s1670 = smul.u32 4, %s24
          %s1671 = smul.addr %s1670, 8
          %s1672 = scalar_lea.vmem %s7, %s1671
          // Predicated region
          $region53: #{conv_dft_forward.1} parent=51 // pred_check
            _
          $region54: #{conv_dft_forward.1} parent=51 // pred_check_branch
            %1674 = sbr.rel (0) target = $region56
          $region55: #{conv_dft_forward.1} parent=51 // pred_region
            // Predicated region
            $region57: #{conv_dft_forward.1} parent=55 // pred_check
              _
            $region58: #{conv_dft_forward.1} parent=55 // pred_check_branch
              %1676 = sbr.rel (0) target = $region60
            $region59: #{conv_dft_forward.1} parent=55 // pred_region
              loop: start=0, step=1, limit=1
              $region61: #{conv_dft_forward.1} parent=59 // loop_pre_header
                _
              $region62: #{conv_dft_forward.1} parent=59 // loop_header
                %s1678 = sphi 0, %s1682
                %p1679 = scmp.ge.s32.totalorder %s1678, 1
                %s1683 = sphi %s1657, %s1657
                %s1684 = sphi %s1672, %s1672
              $region63: #{conv_dft_forward.1} parent=59 // loop_header_branch
                %1681 = sbr.rel (%p1679) target = $region67
              $region64: #{conv_dft_forward.1} parent=59 // loop_body
                %v1685 = vld [vmem:[%s1683] sm:$0xff]
                %1686 = vst [vmem:[%s1684] sm:$0xff] %v1685
                %v1687 = vld [vmem:[%s1683 + $0x8] sm:$0xff]
                %1688 = vst [vmem:[%s1684 + $0x8] sm:$0xff] %v1687
                %v1689 = vld [vmem:[%s1683 + $0x10] sm:$0xff]
                %1690 = vst [vmem:[%s1684 + $0x10] sm:$0xff] %v1689
                %v1691 = vld [vmem:[%s1683 + $0x18] sm:$0xff]
                %1692 = vst [vmem:[%s1684 + $0x18] sm:$0xff] %v1691
                %v1693 = vld [vmem:[%s1683 + $0x20] sm:$0xff]
                %1694 = vst [vmem:[%s1684 + $0x40] sm:$0xff] %v1693
                %v1695 = vld [vmem:[%s1683 + $0x28] sm:$0xff]
                %1696 = vst [vmem:[%s1684 + $0x48] sm:$0xff] %v1695
                %v1697 = vld [vmem:[%s1683 + $0x30] sm:$0xff]
                %1698 = vst [vmem:[%s1684 + $0x50] sm:$0xff] %v1697
                %v1699 = vld [vmem:[%s1683 + $0x38] sm:$0xff]
                %1700 = vst [vmem:[%s1684 + $0x58] sm:$0xff] %v1699
                %v1701 = vld [vmem:[%s1683 + $0x40] sm:$0xff]
                %1702 = vst [vmem:[%s1684 + $0x80] sm:$0xff] %v1701
                %v1703 = vld [vmem:[%s1683 + $0x48] sm:$0xff]
                %1704 = vst [vmem:[%s1684 + $0x88] sm:$0xff] %v1703
                %v1705 = vld [vmem:[%s1683 + $0x50] sm:$0xff]
                %1706 = vst [vmem:[%s1684 + $0x90] sm:$0xff] %v1705
                %v1707 = vld [vmem:[%s1683 + $0x58] sm:$0xff]
                %1708 = vst [vmem:[%s1684 + $0x98] sm:$0xff] %v1707
                %v1709 = vld [vmem:[%s1683 + $0x60] sm:$0xff]
                %1710 = vst [vmem:[%s1684 + $0xc0] sm:$0xff] %v1709
                %v1711 = vld [vmem:[%s1683 + $0x68] sm:$0xff]
                %1712 = vst [vmem:[%s1684 + $0xc8] sm:$0xff] %v1711
                %v1713 = vld [vmem:[%s1683 + $0x70] sm:$0xff]
                %1714 = vst [vmem:[%s1684 + $0xd0] sm:$0xff] %v1713
                %v1715 = vld [vmem:[%s1683 + $0x78] sm:$0xff]
                %1716 = vst [vmem:[%s1684 + $0xd8] sm:$0xff] %v1715
                %v1717 = vld [vmem:[%s1683 + $0x80] sm:$0xff]
                %1718 = vst [vmem:[%s1684 + $0x100] sm:$0xff] %v1717
                %v1719 = vld [vmem:[%s1683 + $0x88] sm:$0xff]
                %1720 = vst [vmem:[%s1684 + $0x108] sm:$0xff] %v1719
                %v1721 = vld [vmem:[%s1683 + $0x90] sm:$0xff]
                %1722 = vst [vmem:[%s1684 + $0x110] sm:$0xff] %v1721
                %v1723 = vld [vmem:[%s1683 + $0x98] sm:$0xff]
                %1724 = vst [vmem:[%s1684 + $0x118] sm:$0xff] %v1723
                %v1725 = vld [vmem:[%s1683 + $0xa0] sm:$0xff]
                %1726 = vst [vmem:[%s1684 + $0x140] sm:$0xff] %v1725
                %v1727 = vld [vmem:[%s1683 + $0xa8] sm:$0xff]
                %1728 = vst [vmem:[%s1684 + $0x148] sm:$0xff] %v1727
                %v1729 = vld [vmem:[%s1683 + $0xb0] sm:$0xff]
                %1730 = vst [vmem:[%s1684 + $0x150] sm:$0xff] %v1729
                %v1731 = vld [vmem:[%s1683 + $0xb8] sm:$0xff]
                %1732 = vst [vmem:[%s1684 + $0x158] sm:$0xff] %v1731
              $region65: #{conv_dft_forward.1} parent=59 // loop_footer
                %s1682 = sadd.s32 1, %s1678
              $region66: #{conv_dft_forward.1} parent=59 // loop_footer_branch
                %1677 = sbr.rel target = $region62
              $region67: #{conv_dft_forward.1} parent=59 // loop_exit
                _
            $region60: #{conv_dft_forward.1} parent=55 // pred_fallthru
              _
            // Predicated region
            $region68: #{conv_dft_forward.1} parent=55 // pred_check
              _
            $region69: #{conv_dft_forward.1} parent=55 // pred_check_branch
              %1734 = sbr.rel target = $region71
            $region70: #{conv_dft_forward.1} parent=55 // pred_region
              _
            $region71: #{conv_dft_forward.1} parent=55 // pred_fallthru
              _
          $region56: #{conv_dft_forward.1} parent=51 // pred_fallthru
            _
          %1735 = vnop
        $region52: #{conv_dft_forward.1} parent=47 // pred_fallthru
          _
        // Predicated region
        $region72: #{conv_dft_forward.1} parent=47 // pred_check
          %p1736 = pneg %p225
        $region73: #{conv_dft_forward.1} parent=47 // pred_check_branch
          %1738 = sbr.rel (%p1736) target = $region75
        $region74: #{conv_dft_forward.1} parent=47 // pred_region
          %s1739 = smul.u32 4, %s24
          %1741 = vsyncadd %s1659, 0
          %s1742 = smul.addr %s1739, 8
          %s1743 = scalar_lea.hbm %s8, %s1742
          %s1744 = sshll.u32 %s1662, 4
          %s1745 = int_to_ptr.vmem [resolvable:$true] %s1744
          %s1746 = sshll.u32 %s1743, 4
          %s1747 = int_to_ptr.hbm [resolvable:$true] %s1746
          %1752 = dma.vmem_to_hbm [thread:$0]  %s1745, 1536, %s1747, %s1659, 512, 1024, 32
        $region75: #{conv_dft_forward.1} parent=47 // pred_fallthru
          _
        // Predicated region
        $region76: #{conv_dft_forward.1} parent=47 // pred_check
          %p1753 = pneg %p251
        $region77: #{conv_dft_forward.1} parent=47 // pred_check_branch
          %1755 = sbr.rel (%p1753) target = $region79
        $region78: #{conv_dft_forward.1} parent=47 // pred_region
          %s1756 = smul.u32 4, %s24
          %s1757 = smul.addr %s1756, 8
          %s1758 = scalar_lea.vmem %s9, %s1757
          // Predicated region
          $region80: #{conv_dft_forward.1} parent=78 // pred_check
            _
          $region81: #{conv_dft_forward.1} parent=78 // pred_check_branch
            %1760 = sbr.rel (0) target = $region83
          $region82: #{conv_dft_forward.1} parent=78 // pred_region
            // Predicated region
            $region84: #{conv_dft_forward.1} parent=82 // pred_check
              _
            $region85: #{conv_dft_forward.1} parent=82 // pred_check_branch
              %1762 = sbr.rel (0) target = $region87
            $region86: #{conv_dft_forward.1} parent=82 // pred_region
              loop: start=0, step=1, limit=1
              $region88: #{conv_dft_forward.1} parent=86 // loop_pre_header
                _
              $region89: #{conv_dft_forward.1} parent=86 // loop_header
                %s1764 = sphi 0, %s1768
                %p1765 = scmp.ge.s32.totalorder %s1764, 1
                %s1769 = sphi %s1666, %s1666
                %s1770 = sphi %s1758, %s1758
              $region90: #{conv_dft_forward.1} parent=86 // loop_header_branch
                %1767 = sbr.rel (%p1765) target = $region94
              $region91: #{conv_dft_forward.1} parent=86 // loop_body
                %v1771 = vld [vmem:[%s1769] sm:$0xff]
                %1772 = vst [vmem:[%s1770] sm:$0xff] %v1771
                %v1773 = vld [vmem:[%s1769 + $0x8] sm:$0xff]
                %1774 = vst [vmem:[%s1770 + $0x8] sm:$0xff] %v1773
                %v1775 = vld [vmem:[%s1769 + $0x10] sm:$0xff]
                %1776 = vst [vmem:[%s1770 + $0x10] sm:$0xff] %v1775
                %v1777 = vld [vmem:[%s1769 + $0x18] sm:$0xff]
                %1778 = vst [vmem:[%s1770 + $0x18] sm:$0xff] %v1777
                %v1779 = vld [vmem:[%s1769 + $0x20] sm:$0xff]
                %1780 = vst [vmem:[%s1770 + $0x40] sm:$0xff] %v1779
                %v1781 = vld [vmem:[%s1769 + $0x28] sm:$0xff]
                %1782 = vst [vmem:[%s1770 + $0x48] sm:$0xff] %v1781
                %v1783 = vld [vmem:[%s1769 + $0x30] sm:$0xff]
                %1784 = vst [vmem:[%s1770 + $0x50] sm:$0xff] %v1783
                %v1785 = vld [vmem:[%s1769 + $0x38] sm:$0xff]
                %1786 = vst [vmem:[%s1770 + $0x58] sm:$0xff] %v1785
                %v1787 = vld [vmem:[%s1769 + $0x40] sm:$0xff]
                %1788 = vst [vmem:[%s1770 + $0x80] sm:$0xff] %v1787
                %v1789 = vld [vmem:[%s1769 + $0x48] sm:$0xff]
                %1790 = vst [vmem:[%s1770 + $0x88] sm:$0xff] %v1789
                %v1791 = vld [vmem:[%s1769 + $0x50] sm:$0xff]
                %1792 = vst [vmem:[%s1770 + $0x90] sm:$0xff] %v1791
                %v1793 = vld [vmem:[%s1769 + $0x58] sm:$0xff]
                %1794 = vst [vmem:[%s1770 + $0x98] sm:$0xff] %v1793
                %v1795 = vld [vmem:[%s1769 + $0x60] sm:$0xff]
                %1796 = vst [vmem:[%s1770 + $0xc0] sm:$0xff] %v1795
                %v1797 = vld [vmem:[%s1769 + $0x68] sm:$0xff]
                %1798 = vst [vmem:[%s1770 + $0xc8] sm:$0xff] %v1797
                %v1799 = vld [vmem:[%s1769 + $0x70] sm:$0xff]
                %1800 = vst [vmem:[%s1770 + $0xd0] sm:$0xff] %v1799
                %v1801 = vld [vmem:[%s1769 + $0x78] sm:$0xff]
                %1802 = vst [vmem:[%s1770 + $0xd8] sm:$0xff] %v1801
              $region92: #{conv_dft_forward.1} parent=86 // loop_footer
                %s1768 = sadd.s32 1, %s1764
              $region93: #{conv_dft_forward.1} parent=86 // loop_footer_branch
                %1763 = sbr.rel target = $region89
              $region94: #{conv_dft_forward.1} parent=86 // loop_exit
                _
            $region87: #{conv_dft_forward.1} parent=82 // pred_fallthru
              _
            // Predicated region
            $region95: #{conv_dft_forward.1} parent=82 // pred_check
              _
            $region96: #{conv_dft_forward.1} parent=82 // pred_check_branch
              %1804 = sbr.rel target = $region98
            $region97: #{conv_dft_forward.1} parent=82 // pred_region
              _
            $region98: #{conv_dft_forward.1} parent=82 // pred_fallthru
              _
          $region83: #{conv_dft_forward.1} parent=78 // pred_fallthru
            _
          %1805 = vnop
        $region79: #{conv_dft_forward.1} parent=47 // pred_fallthru
          _
      $region48: #{conv_dft_forward.1} parent=5 // pred_fallthru
        _
      %p1806 = scmp.le.s32.totalorder 2, %s19
      // Predicated region
      $region99: #{conv_dft_forward.1} parent=5 // pred_check
        %p1807 = pneg %p1806
      $region100: #{conv_dft_forward.1} parent=5 // pred_check_branch
        %1809 = sbr.rel (%p1807) target = $region102
      $region101: #{conv_dft_forward.1} parent=5 // pred_region
        %s1810 = ssub.s32 %s19, 2
        // Predicated region
        $region103: #{conv_dft_forward.1} parent=101 // pred_check
          %p1811 = pneg %p205
        $region104: #{conv_dft_forward.1} parent=101 // pred_check_branch
          %1813 = sbr.rel (%p1811) target = $region106
        $region105: #{conv_dft_forward.1} parent=101 // pred_region
          %s1814 = sand.u32 %s190, 1
          %s1815 = sand.u32 %s190, 1
          %s1816 = smul.addr %s1815, 192
          %s1817 = scalar_lea.vmem [#allocation2], %s1816
        $region106: #{conv_dft_forward.1} parent=101 // pred_fallthru
          _
        // Predicated region
        $region107: #{conv_dft_forward.1} parent=101 // pred_check
          %p1818 = pneg %p231
        $region108: #{conv_dft_forward.1} parent=101 // pred_check_branch
          %1820 = sbr.rel (%p1818) target = $region110
        $region109: #{conv_dft_forward.1} parent=101 // pred_region
          %s1821 = sand.u32 %s216, 1
          %s1822 = scalar_lea.sflag [#allocation4], %s1821
          %s1823 = sand.u32 %s216, 1
          %s1824 = smul.addr %s1823, 96
          %s1825 = scalar_lea.vmem [#allocation3], %s1824
          %1827 = dma.done %s1822, 1536
        $region110: #{conv_dft_forward.1} parent=101 // pred_fallthru
          _
        // Predicated region
        $region111: #{conv_dft_forward.1} parent=101 // pred_check
          %p1828 = pneg %p257
        $region112: #{conv_dft_forward.1} parent=101 // pred_check_branch
          %1830 = sbr.rel (%p1828) target = $region114
        $region113: #{conv_dft_forward.1} parent=101 // pred_region
          %s1831 = sand.u32 %s242, 1
          %s1832 = sand.u32 %s242, 1
          %s1833 = smul.addr %s1832, 128
          %s1834 = scalar_lea.vmem [#allocation5], %s1833
        $region114: #{conv_dft_forward.1} parent=101 // pred_fallthru
          _
      $region102: #{conv_dft_forward.1} parent=5 // pred_fallthru
        _
    $region6: #{conv_dft_forward.1} parent=1 // loop_footer
      %s23 = sadd.s32 1, %s19
    $region7: #{conv_dft_forward.1} parent=1 // loop_footer_branch
      %18 = sbr.rel target = $region3
    $region8: #{conv_dft_forward.1} parent=1 // loop_exit
      _
    %1835 = vsyncpa [#allocation4], 1
    %s1836 = scalar_lea.sflag [#allocation4], 1
    %1837 = vsyncpa %s1836, 1

</llo_original>
